<compile_context>
chip_gen: v7x
topology: tpu7x:2x2x1
jax: 0.10.0
libtpu: 0.0.40
codegen_flags: <defaults>
</compile_context>

<pallas_src>
import functools

import jax
import jax.numpy as jnp
from jax.experimental import pallas as pl
from jax.experimental.pallas import tpu as pltpu


HIDDEN_SIZES = (500, 300, 100, 50, 30)
_LANE = 128
_BF16_ROWS = 16  # bf16 packs 2 rows per sublane -> pad batch to 16


def _round_up(n, m):
    return ((n + m - 1) // m) * m


def _cdiv(a, b):
    return -(-a // b)


def _tpu_kind():
    try:
        return jax.devices()[0].device_kind.lower()
    except Exception:
        return ""


def _use_bf16_sigmoid():
    # v6e / v7x have bf16 EUP/VPU paths; v5e does not.
    kind = _tpu_kind()
    is_v5e = ("v5 lite" in kind) or ("v5e" in kind) or ("v5lite" in kind)
    return not is_v5e


def _sigmoid(z):
    # tanh form: one EUP op plus cheap VPU mul/add (vs. exp + reciprocal).
    return 0.5 * jnp.tanh(0.5 * z) + 0.5


def mlp_kernel(x_ref,
               w1_ref, b1_ref, w2_ref, b2_ref, w3_ref, b3_ref,
               w4_ref, b4_ref, w5_ref, b5_ref, w6_ref, b6_ref,
               out_ref, *, n_sub, sigmoid_bf16):
    layers = ((w1_ref, b1_ref), (w2_ref, b2_ref), (w3_ref, b3_ref),
              (w4_ref, b4_ref), (w5_ref, b5_ref), (w6_ref, b6_ref))
    n_layers = len(layers)
    tb = x_ref.shape[0]
    rows = tb // n_sub
    # Static Python loop over independent row sub-blocks: sub-block j's matmuls can
    # overlap sub-block j-1's tanh/bias epilogue (MXU vs. EUP/VPU slots).
    for s in range(n_sub):
        h = x_ref[s * rows:(s + 1) * rows, :]          # bf16 [rows, in_pad]
        for li, (w_ref, b_ref) in enumerate(layers):
            # bf16 x bf16 -> f32 accumulate on the MXU; bias add in f32.
            h = jnp.dot(h, w_ref[...], preferred_element_type=jnp.float32) + b_ref[...]
            if li < n_layers - 1:
                if sigmoid_bf16:
                    h = _sigmoid(h.astype(jnp.bfloat16))     # bf16 EUP/VPU (v6e/v7x)
                else:
                    h = _sigmoid(h).astype(jnp.bfloat16)     # f32 path (v5e)
        out_ref[s * rows:(s + 1) * rows, :] = h.astype(out_ref.dtype)


def prepare_params(params):
    """Pad feature dims to lane multiples and cast weights to bf16 ONCE (hoisted
    out of the per-call path).  params: list of (W [in, out], b [1, out]) f32."""
    input_size = params[0][0].shape[0]
    num_classes = params[-1][0].shape[1]
    dims = [input_size] + [w.shape[1] for w, _ in params]   # in, 500, 300, 100, 50, 30, C
    pdims = [_round_up(d, _LANE) for d in dims]

    padded = []
    for li, (w, b) in enumerate(params):
        pin, pout = pdims[li], pdims[li + 1]
        wp = jnp.zeros((pin, pout), jnp.float32).at[:w.shape[0], :w.shape[1]].set(w)
        bp = jnp.zeros((1, pout), jnp.float32).at[:, :b.shape[-1]].set(b.reshape(1, -1))
        padded.append((wp.astype(jnp.bfloat16), bp))
    return tuple(padded), tuple(pdims), num_classes


def red_neuronal5_sigm_forward(x, prepared):
    """x: [B, input_size] f32.  prepared: output of prepare_params(params)."""
    padded, pdims, num_classes = prepared
    B, input_size = x.shape
    in_pad, out_pad = pdims[0], pdims[-1]

    kind = _tpu_kind()
    is_v6 = "v6" in kind
    is_v7 = ("v7" in kind) or ("7x" in kind)
    sigmoid_bf16 = _use_bf16_sigmoid()

    # ---- batch tiling ----
    tb_max = 1024 if is_v6 else 512          # v6e: big tiles amortize per-step overhead
    b16 = _round_up(B, _BF16_ROWS)
    n_tiles = _cdiv(b16, tb_max)
    tb = _round_up(_cdiv(b16, n_tiles), _BF16_ROWS)
    # v7x has 2 TensorCores: ensure >= 2 grid steps for moderate batches.
    if is_v7 and _cdiv(b16, tb) == 1 and b16 > _BF16_ROWS:
        tb = _round_up(_cdiv(b16, 2), _BF16_ROWS)
    n_tiles = _cdiv(b16, tb)
    b_pad = n_tiles * tb

    n_sub = 2 if tb >= 256 else 1            # in-kernel row sub-blocking

    xp = jnp.zeros((b_pad, in_pad), jnp.bfloat16).at[:B, :input_size].set(
        x.astype(jnp.bfloat16))

    grid = (n_tiles,)

    in_specs = [pl.BlockSpec((tb, in_pad), lambda i: (i, 0))]
    flat_inputs = [xp]
    for wp, bp in padded:
        in_specs.append(pl.BlockSpec(wp.shape, lambda i: (0, 0)))   # resident weights
        in_specs.append(pl.BlockSpec(bp.shape, lambda i: (0, 0)))   # resident biases
        flat_inputs += [wp, bp]
    out_spec = pl.BlockSpec((tb, out_pad), lambda i: (i, 0))

    # ---- VMEM budget: resident params + double-buffered x/out tiles + live activations ----
    w_bytes = sum(wp.size * 2 + bp.size * 4 for wp, bp in padded)
    x_tile_bytes = 2 * tb * in_pad * 2          # double-buffered bf16 input tile
    o_tile_bytes = 2 * tb * out_pad * 4         # double-buffered f32 output tile
    act_bytes = 4 * tb * max(pdims) * 4         # generous allowance for live activations
    vmem_bytes = int(min(40 << 20,              # headroom on v7x's 64 MiB physical VMEM
                         max(16 << 20,
                             2 * (w_bytes + x_tile_bytes + o_tile_bytes + act_bytes))))

    flops = 2 * b_pad * sum(pdims[i] * pdims[i + 1] for i in range(len(pdims) - 1))
    transcendentals = b_pad * sum(pdims[1:-1])
    bytes_accessed = xp.size * 2 + b_pad * out_pad * 4 + w_bytes

    kernel = functools.partial(mlp_kernel, n_sub=n_sub, sigmoid_bf16=sigmoid_bf16)

    out_padded = pl.pallas_call(
        kernel,
        out_shape=jax.ShapeDtypeStruct((b_pad, out_pad), jnp.float32),
        grid=grid,
        in_specs=in_specs,
        out_specs=out_spec,
        compiler_params=pltpu.CompilerParams(
            dimension_semantics=("parallel",),
            vmem_limit_bytes=vmem_bytes),
        cost_estimate=pl.CostEstimate(
            flops=flops,
            transcendentals=transcendentals,
            bytes_accessed=bytes_accessed),
    )(*flat_inputs)

    return out_padded[:B, :num_classes]


def init_params(key, input_size, num_classes):
    """torch.nn.Linear-style init: U[-1/sqrt(fan_in), +1/sqrt(fan_in)].  W stored as [in, out]."""
    sizes = (input_size,) + HIDDEN_SIZES + (num_classes,)
    params = []
    for i in range(len(sizes) - 1):
        fan_in, fan_out = sizes[i], sizes[i + 1]
        key, kw, kb = jax.random.split(key, 3)
        bound = 1.0 / jnp.sqrt(jnp.float32(fan_in))
        w = jax.random.uniform(kw, (fan_in, fan_out), jnp.float32, -bound, bound)
        b = jax.random.uniform(kb, (1, fan_out), jnp.float32, -bound, bound)
        params.append((w, b))
    return params


def reference_forward(x, params, sigmoid_bf16=True):
    """Pure-JAX reference using the same bf16-input / f32-accumulate / sigmoid-dtype
    math as the kernel."""
    h = x.astype(jnp.bfloat16)
    for i, (w, b) in enumerate(params):
        h = jnp.dot(h, w.astype(jnp.bfloat16),
                    preferred_element_type=jnp.float32) + b
        if i < len(params) - 1:
            if sigmoid_bf16:
                h = _sigmoid(h.astype(jnp.bfloat16))
            else:
                h = _sigmoid(h).astype(jnp.bfloat16)
    return h


if __name__ == "__main__":
    batch = 8
    input_size = 64
    num_classes = 10

    key = jax.random.PRNGKey(0)
    key, kx = jax.random.split(key)
    x = jax.random.normal(kx, (batch, input_size), jnp.float32)

    params = init_params(key, input_size, num_classes)
    prepared = prepare_params(params)          # pad + bf16-cast once, outside hot path

    fwd = jax.jit(lambda xx: red_neuronal5_sigm_forward(xx, prepared))
    out = jax.block_until_ready(fwd(x))

    ref = reference_forward(x, params, sigmoid_bf16=_use_bf16_sigmoid())
    assert out.shape == (batch, num_classes)
    # bf16 activations throughout -> allow ~bf16-level deviation on O(1) logits.
    assert jnp.allclose(out, ref, atol=1e-2, rtol=1e-2), (
        f"max abs diff = {jnp.max(jnp.abs(out - ref))}")

    print("KERNEL_OK")
</pallas_src>

<mosaic_0001>
module attributes {stable_mosaic.version = 11 : i64} {
  func.func @mlp_kernel(%arg0: i32, %arg1: memref<16x128xbf16, #tpu.memory_space<vmem>>, %arg2: memref<128x512xbf16, #tpu.memory_space<vmem>>, %arg3: memref<1x512xf32, #tpu.memory_space<vmem>>, %arg4: memref<512x384xbf16, #tpu.memory_space<vmem>>, %arg5: memref<1x384xf32, #tpu.memory_space<vmem>>, %arg6: memref<384x128xbf16, #tpu.memory_space<vmem>>, %arg7: memref<1x128xf32, #tpu.memory_space<vmem>>, %arg8: memref<128x128xbf16, #tpu.memory_space<vmem>>, %arg9: memref<1x128xf32, #tpu.memory_space<vmem>>, %arg10: memref<128x128xbf16, #tpu.memory_space<vmem>>, %arg11: memref<1x128xf32, #tpu.memory_space<vmem>>, %arg12: memref<128x128xbf16, #tpu.memory_space<vmem>>, %arg13: memref<1x128xf32, #tpu.memory_space<vmem>>, %arg14: memref<16x128xf32, #tpu.memory_space<vmem>>) attributes {dimension_semantics = [#tpu.dimension_semantics<parallel>], iteration_bounds = array<i64: 1>, scalar_prefetch = 0 : i64, scratch_operands = 0 : i64, tpu.core_type = #tpu.core_type<tc>, window_params = [{transform_indices = @transform_0, window_bounds = array<i64: 16, 128>}, {pipeline_mode = #tpu.pipeline_mode<synchronous>, transform_indices = @transform_1, window_bounds = array<i64: 128, 512>}, {pipeline_mode = #tpu.pipeline_mode<synchronous>, transform_indices = @transform_2, window_bounds = array<i64: 1, 512>}, {pipeline_mode = #tpu.pipeline_mode<synchronous>, transform_indices = @transform_3, window_bounds = array<i64: 512, 384>}, {pipeline_mode = #tpu.pipeline_mode<synchronous>, transform_indices = @transform_4, window_bounds = array<i64: 1, 384>}, {pipeline_mode = #tpu.pipeline_mode<synchronous>, transform_indices = @transform_5, window_bounds = array<i64: 384, 128>}, {pipeline_mode = #tpu.pipeline_mode<synchronous>, transform_indices = @transform_6, window_bounds = array<i64: 1, 128>}, {pipeline_mode = #tpu.pipeline_mode<synchronous>, transform_indices = @transform_7, window_bounds = array<i64: 128, 128>}, {pipeline_mode = #tpu.pipeline_mode<synchronous>, transform_indices = @transform_8, window_bounds = array<i64: 1, 128>}, {pipeline_mode = #tpu.pipeline_mode<synchronous>, transform_indices = @transform_9, window_bounds = array<i64: 128, 128>}, {pipeline_mode = #tpu.pipeline_mode<synchronous>, transform_indices = @transform_10, window_bounds = array<i64: 1, 128>}, {pipeline_mode = #tpu.pipeline_mode<synchronous>, transform_indices = @transform_11, window_bounds = array<i64: 128, 128>}, {pipeline_mode = #tpu.pipeline_mode<synchronous>, transform_indices = @transform_12, window_bounds = array<i64: 1, 128>}, {transform_indices = @transform_13, window_bounds = array<i64: 16, 128>}]} {
    %c0 = arith.constant 0 : index
    %c0_0 = arith.constant 0 : index
    %0 = vector.load %arg1[%c0, %c0_0] : memref<16x128xbf16, #tpu.memory_space<vmem>>, vector<16x128xbf16>
    %c0_1 = arith.constant 0 : index
    %c0_2 = arith.constant 0 : index
    %1 = vector.load %arg2[%c0_1, %c0_2] : memref<128x512xbf16, #tpu.memory_space<vmem>>, vector<128x512xbf16>
    %cst = arith.constant dense<0.000000e+00> : vector<16x512xf32>
    %2 = tpu.matmul %0, %1, %cst {dimension_numbers = #tpu.dot_dimension_numbers<[1], [0], [0], [1], [0, 0, 1, 1], [], []>} : vector<16x128xbf16>, vector<128x512xbf16>, vector<16x512xf32> -> vector<16x512xf32>
    %c0_3 = arith.constant 0 : index
    %c0_4 = arith.constant 0 : index
    %3 = vector.load %arg3[%c0_3, %c0_4] : memref<1x512xf32, #tpu.memory_space<vmem>>, vector<1x512xf32>
    %4 = vector.broadcast %3 : vector<1x512xf32> to vector<16x512xf32>
    %5 = arith.addf %2, %4 : vector<16x512xf32>
    %6 = arith.truncf %5 : vector<16x512xf32> to vector<16x512xbf16>
    %cst_5 = arith.constant 5.000000e-01 : bf16
    %7 = vector.broadcast %cst_5 : bf16 to vector<16x512xbf16>
    %8 = arith.mulf %7, %6 : vector<16x512xbf16>
    %9 = math.tanh %8 : vector<16x512xbf16>
    %cst_6 = arith.constant 5.000000e-01 : bf16
    %10 = vector.broadcast %cst_6 : bf16 to vector<16x512xbf16>
    %11 = arith.mulf %10, %9 : vector<16x512xbf16>
    %cst_7 = arith.constant 5.000000e-01 : bf16
    %12 = vector.broadcast %cst_7 : bf16 to vector<16x512xbf16>
    %13 = arith.addf %11, %12 : vector<16x512xbf16>
    %c0_8 = arith.constant 0 : index
    %c0_9 = arith.constant 0 : index
    %14 = vector.load %arg4[%c0_8, %c0_9] : memref<512x384xbf16, #tpu.memory_space<vmem>>, vector<512x384xbf16>
    %cst_10 = arith.constant dense<0.000000e+00> : vector<16x384xf32>
    %15 = tpu.matmul %13, %14, %cst_10 {dimension_numbers = #tpu.dot_dimension_numbers<[1], [0], [0], [1], [0, 0, 1, 1], [], []>} : vector<16x512xbf16>, vector<512x384xbf16>, vector<16x384xf32> -> vector<16x384xf32>
    %c0_11 = arith.constant 0 : index
    %c0_12 = arith.constant 0 : index
    %16 = vector.load %arg5[%c0_11, %c0_12] : memref<1x384xf32, #tpu.memory_space<vmem>>, vector<1x384xf32>
    %17 = vector.broadcast %16 : vector<1x384xf32> to vector<16x384xf32>
    %18 = arith.addf %15, %17 : vector<16x384xf32>
    %19 = arith.truncf %18 : vector<16x384xf32> to vector<16x384xbf16>
    %cst_13 = arith.constant 5.000000e-01 : bf16
    %20 = vector.broadcast %cst_13 : bf16 to vector<16x384xbf16>
    %21 = arith.mulf %20, %19 : vector<16x384xbf16>
    %22 = math.tanh %21 : vector<16x384xbf16>
    %cst_14 = arith.constant 5.000000e-01 : bf16
    %23 = vector.broadcast %cst_14 : bf16 to vector<16x384xbf16>
    %24 = arith.mulf %23, %22 : vector<16x384xbf16>
    %cst_15 = arith.constant 5.000000e-01 : bf16
    %25 = vector.broadcast %cst_15 : bf16 to vector<16x384xbf16>
    %26 = arith.addf %24, %25 : vector<16x384xbf16>
    %c0_16 = arith.constant 0 : index
    %c0_17 = arith.constant 0 : index
    %27 = vector.load %arg6[%c0_16, %c0_17] : memref<384x128xbf16, #tpu.memory_space<vmem>>, vector<384x128xbf16>
    %cst_18 = arith.constant dense<0.000000e+00> : vector<16x128xf32>
    %28 = tpu.matmul %26, %27, %cst_18 {dimension_numbers = #tpu.dot_dimension_numbers<[1], [0], [0], [1], [0, 0, 1, 1], [], []>} : vector<16x384xbf16>, vector<384x128xbf16>, vector<16x128xf32> -> vector<16x128xf32>
    %c0_19 = arith.constant 0 : index
    %c0_20 = arith.constant 0 : index
    %29 = vector.load %arg7[%c0_19, %c0_20] : memref<1x128xf32, #tpu.memory_space<vmem>>, vector<1x128xf32>
    %30 = vector.broadcast %29 : vector<1x128xf32> to vector<16x128xf32>
    %31 = arith.addf %28, %30 : vector<16x128xf32>
    %32 = arith.truncf %31 : vector<16x128xf32> to vector<16x128xbf16>
    %cst_21 = arith.constant 5.000000e-01 : bf16
    %33 = vector.broadcast %cst_21 : bf16 to vector<16x128xbf16>
    %34 = arith.mulf %33, %32 : vector<16x128xbf16>
    %35 = math.tanh %34 : vector<16x128xbf16>
    %cst_22 = arith.constant 5.000000e-01 : bf16
    %36 = vector.broadcast %cst_22 : bf16 to vector<16x128xbf16>
    %37 = arith.mulf %36, %35 : vector<16x128xbf16>
    %cst_23 = arith.constant 5.000000e-01 : bf16
    %38 = vector.broadcast %cst_23 : bf16 to vector<16x128xbf16>
    %39 = arith.addf %37, %38 : vector<16x128xbf16>
    %c0_24 = arith.constant 0 : index
    %c0_25 = arith.constant 0 : index
    %40 = vector.load %arg8[%c0_24, %c0_25] : memref<128x128xbf16, #tpu.memory_space<vmem>>, vector<128x128xbf16>
    %cst_26 = arith.constant dense<0.000000e+00> : vector<16x128xf32>
    %41 = tpu.matmul %39, %40, %cst_26 {dimension_numbers = #tpu.dot_dimension_numbers<[1], [0], [0], [1], [0, 0, 1, 1], [], []>} : vector<16x128xbf16>, vector<128x128xbf16>, vector<16x128xf32> -> vector<16x128xf32>
    %c0_27 = arith.constant 0 : index
    %c0_28 = arith.constant 0 : index
    %42 = vector.load %arg9[%c0_27, %c0_28] : memref<1x128xf32, #tpu.memory_space<vmem>>, vector<1x128xf32>
    %43 = vector.broadcast %42 : vector<1x128xf32> to vector<16x128xf32>
    %44 = arith.addf %41, %43 : vector<16x128xf32>
    %45 = arith.truncf %44 : vector<16x128xf32> to vector<16x128xbf16>
    %cst_29 = arith.constant 5.000000e-01 : bf16
    %46 = vector.broadcast %cst_29 : bf16 to vector<16x128xbf16>
    %47 = arith.mulf %46, %45 : vector<16x128xbf16>
    %48 = math.tanh %47 : vector<16x128xbf16>
    %cst_30 = arith.constant 5.000000e-01 : bf16
    %49 = vector.broadcast %cst_30 : bf16 to vector<16x128xbf16>
    %50 = arith.mulf %49, %48 : vector<16x128xbf16>
    %cst_31 = arith.constant 5.000000e-01 : bf16
    %51 = vector.broadcast %cst_31 : bf16 to vector<16x128xbf16>
    %52 = arith.addf %50, %51 : vector<16x128xbf16>
    %c0_32 = arith.constant 0 : index
    %c0_33 = arith.constant 0 : index
    %53 = vector.load %arg10[%c0_32, %c0_33] : memref<128x128xbf16, #tpu.memory_space<vmem>>, vector<128x128xbf16>
    %cst_34 = arith.constant dense<0.000000e+00> : vector<16x128xf32>
    %54 = tpu.matmul %52, %53, %cst_34 {dimension_numbers = #tpu.dot_dimension_numbers<[1], [0], [0], [1], [0, 0, 1, 1], [], []>} : vector<16x128xbf16>, vector<128x128xbf16>, vector<16x128xf32> -> vector<16x128xf32>
    %c0_35 = arith.constant 0 : index
    %c0_36 = arith.constant 0 : index
    %55 = vector.load %arg11[%c0_35, %c0_36] : memref<1x128xf32, #tpu.memory_space<vmem>>, vector<1x128xf32>
    %56 = vector.broadcast %55 : vector<1x128xf32> to vector<16x128xf32>
    %57 = arith.addf %54, %56 : vector<16x128xf32>
    %58 = arith.truncf %57 : vector<16x128xf32> to vector<16x128xbf16>
    %cst_37 = arith.constant 5.000000e-01 : bf16
    %59 = vector.broadcast %cst_37 : bf16 to vector<16x128xbf16>
    %60 = arith.mulf %59, %58 : vector<16x128xbf16>
    %61 = math.tanh %60 : vector<16x128xbf16>
    %cst_38 = arith.constant 5.000000e-01 : bf16
    %62 = vector.broadcast %cst_38 : bf16 to vector<16x128xbf16>
    %63 = arith.mulf %62, %61 : vector<16x128xbf16>
    %cst_39 = arith.constant 5.000000e-01 : bf16
    %64 = vector.broadcast %cst_39 : bf16 to vector<16x128xbf16>
    %65 = arith.addf %63, %64 : vector<16x128xbf16>
    %c0_40 = arith.constant 0 : index
    %c0_41 = arith.constant 0 : index
    %66 = vector.load %arg12[%c0_40, %c0_41] : memref<128x128xbf16, #tpu.memory_space<vmem>>, vector<128x128xbf16>
    %cst_42 = arith.constant dense<0.000000e+00> : vector<16x128xf32>
    %67 = tpu.matmul %65, %66, %cst_42 {dimension_numbers = #tpu.dot_dimension_numbers<[1], [0], [0], [1], [0, 0, 1, 1], [], []>} : vector<16x128xbf16>, vector<128x128xbf16>, vector<16x128xf32> -> vector<16x128xf32>
    %c0_43 = arith.constant 0 : index
    %c0_44 = arith.constant 0 : index
    %68 = vector.load %arg13[%c0_43, %c0_44] : memref<1x128xf32, #tpu.memory_space<vmem>>, vector<1x128xf32>
    %69 = vector.broadcast %68 : vector<1x128xf32> to vector<16x128xf32>
    %70 = arith.addf %67, %69 : vector<16x128xf32>
    %c0_45 = arith.constant 0 : index
    %c0_46 = arith.constant 0 : index
    %71 = vector.load %arg14[%c0_45, %c0_46] : memref<16x128xf32, #tpu.memory_space<vmem>>, vector<16x128xf32>
    tpu.vector_store %arg14[%c0_45, %c0_46], %70 {strides = array<i32>} : memref<16x128xf32, #tpu.memory_space<vmem>>, vector<16x128xf32>,
    return
  }
  func.func @transform_0(%arg0: i32) -> (i32, i32) {
    %c0_i32 = arith.constant 0 : i32
    %c0_i32_0 = arith.constant 0 : i32
    return %arg0, %c0_i32 : i32, i32
  }
  func.func @transform_1(%arg0: i32) -> (i32, i32) {
    %c0_i32 = arith.constant 0 : i32
    %c0_i32_0 = arith.constant 0 : i32
    %c0_i32_1 = arith.constant 0 : i32
    return %c0_i32, %c0_i32_0 : i32, i32
  }
  func.func @transform_2(%arg0: i32) -> (i32, i32) {
    %c0_i32 = arith.constant 0 : i32
    %c0_i32_0 = arith.constant 0 : i32
    %c0_i32_1 = arith.constant 0 : i32
    return %c0_i32, %c0_i32_0 : i32, i32
  }
  func.func @transform_3(%arg0: i32) -> (i32, i32) {
    %c0_i32 = arith.constant 0 : i32
    %c0_i32_0 = arith.constant 0 : i32
    %c0_i32_1 = arith.constant 0 : i32
    return %c0_i32, %c0_i32_0 : i32, i32
  }
  func.func @transform_4(%arg0: i32) -> (i32, i32) {
    %c0_i32 = arith.constant 0 : i32
    %c0_i32_0 = arith.constant 0 : i32
    %c0_i32_1 = arith.constant 0 : i32
    return %c0_i32, %c0_i32_0 : i32, i32
  }
  func.func @transform_5(%arg0: i32) -> (i32, i32) {
    %c0_i32 = arith.constant 0 : i32
    %c0_i32_0 = arith.constant 0 : i32
    %c0_i32_1 = arith.constant 0 : i32
    return %c0_i32, %c0_i32_0 : i32, i32
  }
  func.func @transform_6(%arg0: i32) -> (i32, i32) {
    %c0_i32 = arith.constant 0 : i32
    %c0_i32_0 = arith.constant 0 : i32
    %c0_i32_1 = arith.constant 0 : i32
    return %c0_i32, %c0_i32_0 : i32, i32
  }
  func.func @transform_7(%arg0: i32) -> (i32, i32) {
    %c0_i32 = arith.constant 0 : i32
    %c0_i32_0 = arith.constant 0 : i32
    %c0_i32_1 = arith.constant 0 : i32
    return %c0_i32, %c0_i32_0 : i32, i32
  }
  func.func @transform_8(%arg0: i32) -> (i32, i32) {
    %c0_i32 = arith.constant 0 : i32
    %c0_i32_0 = arith.constant 0 : i32
    %c0_i32_1 = arith.constant 0 : i32
    return %c0_i32, %c0_i32_0 : i32, i32
  }
  func.func @transform_9(%arg0: i32) -> (i32, i32) {
    %c0_i32 = arith.constant 0 : i32
    %c0_i32_0 = arith.constant 0 : i32
    %c0_i32_1 = arith.constant 0 : i32
    return %c0_i32, %c0_i32_0 : i32, i32
  }
  func.func @transform_10(%arg0: i32) -> (i32, i32) {
    %c0_i32 = arith.constant 0 : i32
    %c0_i32_0 = arith.constant 0 : i32
    %c0_i32_1 = arith.constant 0 : i32
    return %c0_i32, %c0_i32_0 : i32, i32
  }
  func.func @transform_11(%arg0: i32) -> (i32, i32) {
    %c0_i32 = arith.constant 0 : i32
    %c0_i32_0 = arith.constant 0 : i32
    %c0_i32_1 = arith.constant 0 : i32
    return %c0_i32, %c0_i32_0 : i32, i32
  }
  func.func @transform_12(%arg0: i32) -> (i32, i32) {
    %c0_i32 = arith.constant 0 : i32
    %c0_i32_0 = arith.constant 0 : i32
    %c0_i32_1 = arith.constant 0 : i32
    return %c0_i32, %c0_i32_0 : i32, i32
  }
  func.func @transform_13(%arg0: i32) -> (i32, i32) {
    %c0_i32 = arith.constant 0 : i32
    %c0_i32_0 = arith.constant 0 : i32
    return %arg0, %c0_i32 : i32, i32
  }
}

</mosaic_0001>

<llo_original>
// kernel: _lambda_.1
$region0: #{_lambda_.1}
  #allocation0 [shape = 'u32[]', space=smem, size = 0x4, offset = 0x4, fixed_abs, tag = 'smem constant byte address 0x4 - core index']
  #allocation1 [shape = 'u32[144,128]{1,0:T(1,128)}', space=vmem, size = 0x12000, scoped, tag = 'internal scratch']
  %s0 = inlined_call_operand.vmem [shape: bf16[16,128], index: 0, kind: input, shape index: {}]
  %s1 = inlined_call_operand.vmem [shape: bf16[128,512], index: 1, kind: input, shape index: {}]
  %s2 = inlined_call_operand.vmem [shape: f32[1,512], index: 2, kind: input, shape index: {}]
  %s3 = inlined_call_operand.vmem [shape: bf16[512,384], index: 3, kind: input, shape index: {}]
  %s4 = inlined_call_operand.vmem [shape: f32[1,384], index: 4, kind: input, shape index: {}]
  %s5 = inlined_call_operand.vmem [shape: bf16[384,128], index: 5, kind: input, shape index: {}]
  %s6 = inlined_call_operand.vmem [shape: f32[1,128], index: 6, kind: input, shape index: {}]
  %s7 = inlined_call_operand.vmem [shape: bf16[128,128], index: 7, kind: input, shape index: {}]
  %s8 = inlined_call_operand.vmem [shape: f32[1,128], index: 8, kind: input, shape index: {}]
  %s9 = inlined_call_operand.vmem [shape: bf16[128,128], index: 9, kind: input, shape index: {}]
  %s10 = inlined_call_operand.vmem [shape: f32[1,128], index: 10, kind: input, shape index: {}]
  %s11 = inlined_call_operand.vmem [shape: bf16[128,128], index: 11, kind: input, shape index: {}]
  %s12 = inlined_call_operand.vmem [shape: f32[1,128], index: 12, kind: input, shape index: {}]
  %s13 = inlined_call_operand.vmem [shape: f32[16,128], index: 13, kind: output, shape index: {}]
  %s14 = sld [smem:[#allocation0]]
  $region62: #{_lambda_.1} parent=0
    _
  %s16 = ssub.s32 1, %s14
  %s17 = scalar_select 0, %s16, %s14
  // Predicated region
  $region2: #{_lambda_.1} parent=0 // pred_check
    _
  $region3: #{_lambda_.1} parent=0 // pred_check_branch
    %19 = sbr.rel (0) target = $region5
  $region4: #{_lambda_.1} parent=0 // pred_region
    _
  $region5: #{_lambda_.1} parent=0 // pred_fallthru
    _
  // Predicated region
  $region6: #{_lambda_.1} parent=0 // pred_check
    _
  $region7: #{_lambda_.1} parent=0 // pred_check_branch
    %21 = sbr.rel (0) target = $region9
  $region8: #{_lambda_.1} parent=0 // pred_region
    _
  $region9: #{_lambda_.1} parent=0 // pred_fallthru
    _
  // Predicated region
  $region10: #{_lambda_.1} parent=0 // pred_check
    _
  $region11: #{_lambda_.1} parent=0 // pred_check_branch
    %23 = sbr.rel (0) target = $region13
  $region12: #{_lambda_.1} parent=0 // pred_region
    _
  $region13: #{_lambda_.1} parent=0 // pred_fallthru
    _
  // Predicated region
  $region14: #{_lambda_.1} parent=0 // pred_check
    _
  $region15: #{_lambda_.1} parent=0 // pred_check_branch
    %25 = sbr.rel (0) target = $region17
  $region16: #{_lambda_.1} parent=0 // pred_region
    _
  $region17: #{_lambda_.1} parent=0 // pred_fallthru
    _
  // Predicated region
  $region18: #{_lambda_.1} parent=0 // pred_check
    _
  $region19: #{_lambda_.1} parent=0 // pred_check_branch
    %27 = sbr.rel (0) target = $region21
  $region20: #{_lambda_.1} parent=0 // pred_region
    _
  $region21: #{_lambda_.1} parent=0 // pred_fallthru
    _
  // Predicated region
  $region22: #{_lambda_.1} parent=0 // pred_check
    _
  $region23: #{_lambda_.1} parent=0 // pred_check_branch
    %29 = sbr.rel (0) target = $region25
  $region24: #{_lambda_.1} parent=0 // pred_region
    _
  $region25: #{_lambda_.1} parent=0 // pred_fallthru
    _
  // Predicated region
  $region26: #{_lambda_.1} parent=0 // pred_check
    _
  $region27: #{_lambda_.1} parent=0 // pred_check_branch
    %31 = sbr.rel (0) target = $region29
  $region28: #{_lambda_.1} parent=0 // pred_region
    _
  $region29: #{_lambda_.1} parent=0 // pred_fallthru
    _
  // Predicated region
  $region30: #{_lambda_.1} parent=0 // pred_check
    _
  $region31: #{_lambda_.1} parent=0 // pred_check_branch
    %33 = sbr.rel (0) target = $region33
  $region32: #{_lambda_.1} parent=0 // pred_region
    _
  $region33: #{_lambda_.1} parent=0 // pred_fallthru
    _
  // Predicated region
  $region34: #{_lambda_.1} parent=0 // pred_check
    _
  $region35: #{_lambda_.1} parent=0 // pred_check_branch
    %35 = sbr.rel (0) target = $region37
  $region36: #{_lambda_.1} parent=0 // pred_region
    _
  $region37: #{_lambda_.1} parent=0 // pred_fallthru
    _
  // Predicated region
  $region38: #{_lambda_.1} parent=0 // pred_check
    _
  $region39: #{_lambda_.1} parent=0 // pred_check_branch
    %37 = sbr.rel (0) target = $region41
  $region40: #{_lambda_.1} parent=0 // pred_region
    _
  $region41: #{_lambda_.1} parent=0 // pred_fallthru
    _
  // Predicated region
  $region42: #{_lambda_.1} parent=0 // pred_check
    _
  $region43: #{_lambda_.1} parent=0 // pred_check_branch
    %39 = sbr.rel (0) target = $region45
  $region44: #{_lambda_.1} parent=0 // pred_region
    _
  $region45: #{_lambda_.1} parent=0 // pred_fallthru
    _
  // Predicated region
  $region46: #{_lambda_.1} parent=0 // pred_check
    _
  $region47: #{_lambda_.1} parent=0 // pred_check_branch
    %41 = sbr.rel (0) target = $region49
  $region48: #{_lambda_.1} parent=0 // pred_region
    _
  $region49: #{_lambda_.1} parent=0 // pred_fallthru
    _
  // Predicated region
  $region50: #{_lambda_.1} parent=0 // pred_check
    _
  $region51: #{_lambda_.1} parent=0 // pred_check_branch
    %43 = sbr.rel (0) target = $region53
  $region52: #{_lambda_.1} parent=0 // pred_region
    _
  $region53: #{_lambda_.1} parent=0 // pred_fallthru
    _
  %v46 = vld [vmem:[%s0] sm:$0xf]
  %v47 = vld [vmem:[%s0 + $0x4] sm:$0xf]
  %v48 = vld [vmem:[%s1] sm:$0xff]
  %v49 = vld [vmem:[%s1 + $0x8] sm:$0xff]
  %v50 = vld [vmem:[%s1 + $0x10] sm:$0xff]
  %v51 = vld [vmem:[%s1 + $0x18] sm:$0xff]
  %v52 = vld [vmem:[%s1 + $0x20] sm:$0xff]
  %v53 = vld [vmem:[%s1 + $0x28] sm:$0xff]
  %v54 = vld [vmem:[%s1 + $0x30] sm:$0xff]
  %v55 = vld [vmem:[%s1 + $0x38] sm:$0xff]
  %v56 = vld [vmem:[%s1 + $0x40] sm:$0xff]
  %v57 = vld [vmem:[%s1 + $0x48] sm:$0xff]
  %v58 = vld [vmem:[%s1 + $0x50] sm:$0xff]
  %v59 = vld [vmem:[%s1 + $0x58] sm:$0xff]
  %v60 = vld [vmem:[%s1 + $0x60] sm:$0xff]
  %v61 = vld [vmem:[%s1 + $0x68] sm:$0xff]
  %v62 = vld [vmem:[%s1 + $0x70] sm:$0xff]
  %v63 = vld [vmem:[%s1 + $0x78] sm:$0xff]
  %v64 = vld [vmem:[%s1 + $0x80] sm:$0xff]
  %v65 = vld [vmem:[%s1 + $0x88] sm:$0xff]
  %v66 = vld [vmem:[%s1 + $0x90] sm:$0xff]
  %v67 = vld [vmem:[%s1 + $0x98] sm:$0xff]
  %v68 = vld [vmem:[%s1 + $0xa0] sm:$0xff]
  %v69 = vld [vmem:[%s1 + $0xa8] sm:$0xff]
  %v70 = vld [vmem:[%s1 + $0xb0] sm:$0xff]
  %v71 = vld [vmem:[%s1 + $0xb8] sm:$0xff]
  %v72 = vld [vmem:[%s1 + $0xc0] sm:$0xff]
  %v73 = vld [vmem:[%s1 + $0xc8] sm:$0xff]
  %v74 = vld [vmem:[%s1 + $0xd0] sm:$0xff]
  %v75 = vld [vmem:[%s1 + $0xd8] sm:$0xff]
  %v76 = vld [vmem:[%s1 + $0xe0] sm:$0xff]
  %v77 = vld [vmem:[%s1 + $0xe8] sm:$0xff]
  %v78 = vld [vmem:[%s1 + $0xf0] sm:$0xff]
  %v79 = vld [vmem:[%s1 + $0xf8] sm:$0xff]
  %v80 = vld [vmem:[%s2] sm:$0xf]
  %v82 = vlaneseq
  %v83 = vshrl.u32 %v82, 7
  %v84 = vsub.s32 0, %v83
  %v85 = vrot.slane %v80, %v84
  %v86 = vlaneseq
  %v87 = vshrl.u32 %v86, 7
  %v88 = vsub.s32 1, %v87
  %v89 = vrot.slane %v80, %v88
  %v90 = vlaneseq
  %v91 = vshrl.u32 %v90, 7
  %v92 = vsub.s32 2, %v91
  %v93 = vrot.slane %v80, %v92
  %v94 = vlaneseq
  %v95 = vshrl.u32 %v94, 7
  %v96 = vsub.s32 3, %v95
  %v97 = vrot.slane %v80, %v96
  %v104 = vunpack.c.l.b16 %v46
  %v105 = vunpack.c.l.b16 %v47
  %v106 = vpack.c.b16 %v105, %v104
  %v140 = vunpack.c.l.b16 %v48
  %v141 = vunpack.c.h.b16 %v48
  %v142 = vunpack.c.l.b16 %v49
  %v143 = vunpack.c.h.b16 %v49
  %v144 = vunpack.c.l.b16 %v50
  %v145 = vunpack.c.h.b16 %v50
  %v146 = vunpack.c.l.b16 %v51
  %v147 = vunpack.c.h.b16 %v51
  %v148 = vunpack.c.l.b16 %v52
  %v149 = vunpack.c.h.b16 %v52
  %v150 = vunpack.c.l.b16 %v53
  %v151 = vunpack.c.h.b16 %v53
  %v152 = vunpack.c.l.b16 %v54
  %v153 = vunpack.c.h.b16 %v54
  %v154 = vunpack.c.l.b16 %v55
  %v155 = vunpack.c.h.b16 %v55
  %v156 = vunpack.c.l.b16 %v56
  %v157 = vunpack.c.h.b16 %v56
  %v158 = vunpack.c.l.b16 %v57
  %v159 = vunpack.c.h.b16 %v57
  %v160 = vunpack.c.l.b16 %v58
  %v161 = vunpack.c.h.b16 %v58
  %v162 = vunpack.c.l.b16 %v59
  %v163 = vunpack.c.h.b16 %v59
  %v164 = vunpack.c.l.b16 %v60
  %v165 = vunpack.c.h.b16 %v60
  %v166 = vunpack.c.l.b16 %v61
  %v167 = vunpack.c.h.b16 %v61
  %v168 = vunpack.c.l.b16 %v62
  %v169 = vunpack.c.h.b16 %v62
  %v170 = vunpack.c.l.b16 %v63
  %v171 = vunpack.c.h.b16 %v63
  %v172 = vunpack.c.l.b16 %v64
  %v173 = vunpack.c.h.b16 %v64
  %v174 = vunpack.c.l.b16 %v65
  %v175 = vunpack.c.h.b16 %v65
  %v176 = vunpack.c.l.b16 %v66
  %v177 = vunpack.c.h.b16 %v66
  %v178 = vunpack.c.l.b16 %v67
  %v179 = vunpack.c.h.b16 %v67
  %v180 = vunpack.c.l.b16 %v68
  %v181 = vunpack.c.h.b16 %v68
  %v182 = vunpack.c.l.b16 %v69
  %v183 = vunpack.c.h.b16 %v69
  %v184 = vunpack.c.l.b16 %v70
  %v185 = vunpack.c.h.b16 %v70
  %v186 = vunpack.c.l.b16 %v71
  %v187 = vunpack.c.h.b16 %v71
  %v188 = vunpack.c.l.b16 %v72
  %v189 = vunpack.c.h.b16 %v72
  %v190 = vunpack.c.l.b16 %v73
  %v191 = vunpack.c.h.b16 %v73
  %v192 = vunpack.c.l.b16 %v74
  %v193 = vunpack.c.h.b16 %v74
  %v194 = vunpack.c.l.b16 %v75
  %v195 = vunpack.c.h.b16 %v75
  %v196 = vunpack.c.l.b16 %v76
  %v197 = vunpack.c.h.b16 %v76
  %v198 = vunpack.c.l.b16 %v77
  %v199 = vunpack.c.h.b16 %v77
  %v200 = vunpack.c.l.b16 %v78
  %v201 = vunpack.c.h.b16 %v78
  %v202 = vunpack.c.l.b16 %v79
  %v203 = vunpack.c.h.b16 %v79
  %v204 = vpack.c.b16 %v144, %v140
  %v205 = vpack.c.b16 %v145, %v141
  %v206 = vpack.c.b16 %v146, %v142
  %v207 = vpack.c.b16 %v147, %v143
  %v208 = vpack.c.b16 %v152, %v148
  %v209 = vpack.c.b16 %v153, %v149
  %v210 = vpack.c.b16 %v154, %v150
  %v211 = vpack.c.b16 %v155, %v151
  %v212 = vpack.c.b16 %v160, %v156
  %v213 = vpack.c.b16 %v161, %v157
  %v214 = vpack.c.b16 %v162, %v158
  %v215 = vpack.c.b16 %v163, %v159
  %v216 = vpack.c.b16 %v168, %v164
  %v217 = vpack.c.b16 %v169, %v165
  %v218 = vpack.c.b16 %v170, %v166
  %v219 = vpack.c.b16 %v171, %v167
  %v220 = vpack.c.b16 %v176, %v172
  %v221 = vpack.c.b16 %v177, %v173
  %v222 = vpack.c.b16 %v178, %v174
  %v223 = vpack.c.b16 %v179, %v175
  %v224 = vpack.c.b16 %v184, %v180
  %v225 = vpack.c.b16 %v185, %v181
  %v226 = vpack.c.b16 %v186, %v182
  %v227 = vpack.c.b16 %v187, %v183
  %v228 = vpack.c.b16 %v192, %v188
  %v229 = vpack.c.b16 %v193, %v189
  %v230 = vpack.c.b16 %v194, %v190
  %v231 = vpack.c.b16 %v195, %v191
  %v232 = vpack.c.b16 %v200, %v196
  %v233 = vpack.c.b16 %v201, %v197
  %v234 = vpack.c.b16 %v202, %v198
  %v235 = vpack.c.b16 %v203, %v199
  %268 = vmatprep.subr.bf16.mxu0 %v205
  %269 = vmatpush1.bf16.msra.mxu0 %v204
  %270 = vmatprep.subr.bf16.mxu0 %v209
  %271 = vmatpush1.bf16.msra.mxu0 %v208
  %272 = vmatprep.subr.bf16.mxu0 %v213
  %273 = vmatpush1.bf16.msra.mxu0 %v212
  %274 = vmatprep.subr.bf16.mxu0 %v217
  %275 = vmatpush1.bf16.msra.mxu0 %v216
  %276 = vmatprep.subr.bf16.mxu0 %v221
  %277 = vmatpush1.bf16.msra.mxu0 %v220
  %278 = vmatprep.subr.bf16.mxu0 %v225
  %279 = vmatpush1.bf16.msra.mxu0 %v224
  %280 = vmatprep.subr.bf16.mxu0 %v229
  %281 = vmatpush1.bf16.msra.mxu0 %v228
  %282 = vmatprep.subr.bf16.mxu0 %v233
  %283 = vmatpush1.bf16.msra.mxu0 %v232
  %284 = vmatprep.subr.bf16.mxu0 0
  %285 = vmatpush1.bf16.msra.mxu0 0
  %286 = vmatprep.subr.bf16.mxu0 0
  %287 = vmatpush1.bf16.msra.mxu0 0
  %288 = vmatprep.subr.bf16.mxu0 0
  %289 = vmatpush1.bf16.msra.mxu0 0
  %290 = vmatprep.subr.bf16.mxu0 0
  %291 = vmatpush1.bf16.msra.mxu0 0
  %292 = vmatprep.subr.bf16.mxu0 0
  %293 = vmatpush1.bf16.msra.mxu0 0
  %294 = vmatprep.subr.bf16.mxu0 0
  %295 = vmatpush1.bf16.msra.mxu0 0
  %296 = vmatprep.subr.bf16.mxu0 0
  %297 = vmatpush1.bf16.msra.mxu0 0
  %298 = vmatprep.subr.bf16.mxu0 0
  %299 = vmatpush1.bf16.msra.mxu0 0
  %300 = vmatprep.mubr.bf16.mxu0 0
  %301 = vmatmul.mubr.bf16.gmra.mrb[0].mxu0 %v106
  %v302 = vpop.f32.mrb[0].mxu0
  %v303 = vadd.f32 %v85, %v302
  %v304 = vpop.f32.mrb[0].mxu0
  %v305 = vadd.f32 %v89, %v304
  %v306 = vpop.f32.mrb[0].mxu0
  %v307 = vadd.f32 %v85, %v306
  %v308 = vpop.f32.mrb[0].mxu0
  %v309 = vadd.f32 %v89, %v308
  %310 = vdwg.mxu0
  %311 = vmatprep.subr.bf16.mxu0 %v207
  %312 = vmatpush1.bf16.msra.mxu0 %v206
  %313 = vmatprep.subr.bf16.mxu0 %v211
  %314 = vmatpush1.bf16.msra.mxu0 %v210
  %315 = vmatprep.subr.bf16.mxu0 %v215
  %316 = vmatpush1.bf16.msra.mxu0 %v214
  %317 = vmatprep.subr.bf16.mxu0 %v219
  %318 = vmatpush1.bf16.msra.mxu0 %v218
  %319 = vmatprep.subr.bf16.mxu0 %v223
  %320 = vmatpush1.bf16.msra.mxu0 %v222
  %321 = vmatprep.subr.bf16.mxu0 %v227
  %322 = vmatpush1.bf16.msra.mxu0 %v226
  %323 = vmatprep.subr.bf16.mxu0 %v231
  %324 = vmatpush1.bf16.msra.mxu0 %v230
  %325 = vmatprep.subr.bf16.mxu0 %v235
  %326 = vmatpush1.bf16.msra.mxu0 %v234
  %327 = vmatprep.subr.bf16.mxu0 0
  %328 = vmatpush1.bf16.msra.mxu0 0
  %329 = vmatprep.subr.bf16.mxu0 0
  %330 = vmatpush1.bf16.msra.mxu0 0
  %331 = vmatprep.subr.bf16.mxu0 0
  %332 = vmatpush1.bf16.msra.mxu0 0
  %333 = vmatprep.subr.bf16.mxu0 0
  %334 = vmatpush1.bf16.msra.mxu0 0
  %335 = vmatprep.subr.bf16.mxu0 0
  %336 = vmatpush1.bf16.msra.mxu0 0
  %337 = vmatprep.subr.bf16.mxu0 0
  %338 = vmatpush1.bf16.msra.mxu0 0
  %339 = vmatprep.subr.bf16.mxu0 0
  %340 = vmatpush1.bf16.msra.mxu0 0
  %341 = vmatprep.subr.bf16.mxu0 0
  %342 = vmatpush1.bf16.msra.mxu0 0
  %343 = vmatprep.mubr.bf16.mxu0 0
  %344 = vmatmul.mubr.bf16.gmra.mrb[0].mxu0 %v106
  %v345 = vpop.f32.mrb[0].mxu0
  %v346 = vadd.f32 %v93, %v345
  %v347 = vpop.f32.mrb[0].mxu0
  %v348 = vadd.f32 %v97, %v347
  %v349 = vpop.f32.mrb[0].mxu0
  %v350 = vadd.f32 %v93, %v349
  %v351 = vpop.f32.mrb[0].mxu0
  %v352 = vadd.f32 %v97, %v351
  %353 = vdwg.mxu0
  %v354 = vpack.c.bf16 %v307, %v303
  %v355 = vpack.c.bf16 %v309, %v305
  %v356 = vpack.c.bf16 %v350, %v346
  %v357 = vpack.c.bf16 %v352, %v348
  %v358 = vmul.bf16 %v354, 1056980736
  %v359 = vmul.bf16 %v355, 1056980736
  %v360 = vmul.bf16 %v356, 1056980736
  %v361 = vmul.bf16 %v357, 1056980736
  %v362 = vtanh.bf16.pop %v358
  %v363 = vtanh.bf16.pop %v359
  %v364 = vtanh.bf16.pop %v360
  %v365 = vtanh.bf16.pop %v361
  %v366 = vmul.bf16 %v362, 1056980736
  %v367 = vmul.bf16 %v363, 1056980736
  %v368 = vmul.bf16 %v364, 1056980736
  %v369 = vmul.bf16 %v365, 1056980736
  %v370 = vadd.bf16 %v366, 1056980736
  %v371 = vadd.bf16 %v367, 1056980736
  %v372 = vadd.bf16 %v368, 1056980736
  %v373 = vadd.bf16 %v369, 1056980736
  %v374 = vld [vmem:[%s3] sm:$0xff]
  %v375 = vld [vmem:[%s3 + $0x8] sm:$0xf]
  %v376 = vld [vmem:[%s3 + $0xc] sm:$0xff]
  %v377 = vld [vmem:[%s3 + $0x14] sm:$0xf]
  %v378 = vld [vmem:[%s3 + $0x18] sm:$0xff]
  %v379 = vld [vmem:[%s3 + $0x20] sm:$0xf]
  %v380 = vld [vmem:[%s3 + $0x24] sm:$0xff]
  %v381 = vld [vmem:[%s3 + $0x2c] sm:$0xf]
  %v382 = vld [vmem:[%s3 + $0x30] sm:$0xff]
  %v383 = vld [vmem:[%s3 + $0x38] sm:$0xf]
  %v384 = vld [vmem:[%s3 + $0x3c] sm:$0xff]
  %v385 = vld [vmem:[%s3 + $0x44] sm:$0xf]
  %v386 = vld [vmem:[%s3 + $0x48] sm:$0xff]
  %v387 = vld [vmem:[%s3 + $0x50] sm:$0xf]
  %v388 = vld [vmem:[%s3 + $0x54] sm:$0xff]
  %v389 = vld [vmem:[%s3 + $0x5c] sm:$0xf]
  %v390 = vld [vmem:[%s3 + $0x60] sm:$0xff]
  %v391 = vld [vmem:[%s3 + $0x68] sm:$0xf]
  %v392 = vld [vmem:[%s3 + $0x6c] sm:$0xff]
  %v393 = vld [vmem:[%s3 + $0x74] sm:$0xf]
  %v394 = vld [vmem:[%s3 + $0x78] sm:$0xff]
  %v395 = vld [vmem:[%s3 + $0x80] sm:$0xf]
  %v396 = vld [vmem:[%s3 + $0x84] sm:$0xff]
  %v397 = vld [vmem:[%s3 + $0x8c] sm:$0xf]
  %v398 = vld [vmem:[%s3 + $0x90] sm:$0xff]
  %v399 = vld [vmem:[%s3 + $0x98] sm:$0xf]
  %v400 = vld [vmem:[%s3 + $0x9c] sm:$0xff]
  %v401 = vld [vmem:[%s3 + $0xa4] sm:$0xf]
  %v402 = vld [vmem:[%s3 + $0xa8] sm:$0xff]
  %v403 = vld [vmem:[%s3 + $0xb0] sm:$0xf]
  %v404 = vld [vmem:[%s3 + $0xb4] sm:$0xff]
  %v405 = vld [vmem:[%s3 + $0xbc] sm:$0xf]
  %v406 = vld [vmem:[%s3 + $0xc0] sm:$0xff]
  %v407 = vld [vmem:[%s3 + $0xc8] sm:$0xf]
  %v408 = vld [vmem:[%s3 + $0xcc] sm:$0xff]
  %v409 = vld [vmem:[%s3 + $0xd4] sm:$0xf]
  %v410 = vld [vmem:[%s3 + $0xd8] sm:$0xff]
  %v411 = vld [vmem:[%s3 + $0xe0] sm:$0xf]
  %v412 = vld [vmem:[%s3 + $0xe4] sm:$0xff]
  %v413 = vld [vmem:[%s3 + $0xec] sm:$0xf]
  %v414 = vld [vmem:[%s3 + $0xf0] sm:$0xff]
  %v415 = vld [vmem:[%s3 + $0xf8] sm:$0xf]
  %v416 = vld [vmem:[%s3 + $0xfc] sm:$0xff]
  %v417 = vld [vmem:[%s3 + $0x104] sm:$0xf]
  %v418 = vld [vmem:[%s3 + $0x108] sm:$0xff]
  %v419 = vld [vmem:[%s3 + $0x110] sm:$0xf]
  %v420 = vld [vmem:[%s3 + $0x114] sm:$0xff]
  %v421 = vld [vmem:[%s3 + $0x11c] sm:$0xf]
  %v422 = vld [vmem:[%s3 + $0x120] sm:$0xff]
  %v423 = vld [vmem:[%s3 + $0x128] sm:$0xf]
  %v424 = vld [vmem:[%s3 + $0x12c] sm:$0xff]
  %v425 = vld [vmem:[%s3 + $0x134] sm:$0xf]
  %v426 = vld [vmem:[%s3 + $0x138] sm:$0xff]
  %v427 = vld [vmem:[%s3 + $0x140] sm:$0xf]
  %v428 = vld [vmem:[%s3 + $0x144] sm:$0xff]
  %v429 = vld [vmem:[%s3 + $0x14c] sm:$0xf]
  %v430 = vld [vmem:[%s3 + $0x150] sm:$0xff]
  %v431 = vld [vmem:[%s3 + $0x158] sm:$0xf]
  %v432 = vld [vmem:[%s3 + $0x15c] sm:$0xff]
  %v433 = vld [vmem:[%s3 + $0x164] sm:$0xf]
  %v434 = vld [vmem:[%s3 + $0x168] sm:$0xff]
  %v435 = vld [vmem:[%s3 + $0x170] sm:$0xf]
  %v436 = vld [vmem:[%s3 + $0x174] sm:$0xff]
  %v437 = vld [vmem:[%s3 + $0x17c] sm:$0xf]
  %v438 = vld [vmem:[%s3 + $0x180] sm:$0xff]
  %v439 = vld [vmem:[%s3 + $0x188] sm:$0xf]
  %v440 = vld [vmem:[%s3 + $0x18c] sm:$0xff]
  %v441 = vld [vmem:[%s3 + $0x194] sm:$0xf]
  %v442 = vld [vmem:[%s3 + $0x198] sm:$0xff]
  %v443 = vld [vmem:[%s3 + $0x1a0] sm:$0xf]
  %v444 = vld [vmem:[%s3 + $0x1a4] sm:$0xff]
  %v445 = vld [vmem:[%s3 + $0x1ac] sm:$0xf]
  %v446 = vld [vmem:[%s3 + $0x1b0] sm:$0xff]
  %v447 = vld [vmem:[%s3 + $0x1b8] sm:$0xf]
  %v448 = vld [vmem:[%s3 + $0x1bc] sm:$0xff]
  %v449 = vld [vmem:[%s3 + $0x1c4] sm:$0xf]
  %v450 = vld [vmem:[%s3 + $0x1c8] sm:$0xff]
  %v451 = vld [vmem:[%s3 + $0x1d0] sm:$0xf]
  %v452 = vld [vmem:[%s3 + $0x1d4] sm:$0xff]
  %v453 = vld [vmem:[%s3 + $0x1dc] sm:$0xf]
  %v454 = vld [vmem:[%s3 + $0x1e0] sm:$0xff]
  %v455 = vld [vmem:[%s3 + $0x1e8] sm:$0xf]
  %v456 = vld [vmem:[%s3 + $0x1ec] sm:$0xff]
  %v457 = vld [vmem:[%s3 + $0x1f4] sm:$0xf]
  %v458 = vld [vmem:[%s3 + $0x1f8] sm:$0xff]
  %v459 = vld [vmem:[%s3 + $0x200] sm:$0xf]
  %v460 = vld [vmem:[%s3 + $0x204] sm:$0xff]
  %v461 = vld [vmem:[%s3 + $0x20c] sm:$0xf]
  %v462 = vld [vmem:[%s3 + $0x210] sm:$0xff]
  %v463 = vld [vmem:[%s3 + $0x218] sm:$0xf]
  %v464 = vld [vmem:[%s3 + $0x21c] sm:$0xff]
  %v465 = vld [vmem:[%s3 + $0x224] sm:$0xf]
  %v466 = vld [vmem:[%s3 + $0x228] sm:$0xff]
  %v467 = vld [vmem:[%s3 + $0x230] sm:$0xf]
  %v468 = vld [vmem:[%s3 + $0x234] sm:$0xff]
  %v469 = vld [vmem:[%s3 + $0x23c] sm:$0xf]
  %v470 = vld [vmem:[%s3 + $0x240] sm:$0xff]
  %v471 = vld [vmem:[%s3 + $0x248] sm:$0xf]
  %v472 = vld [vmem:[%s3 + $0x24c] sm:$0xff]
  %v473 = vld [vmem:[%s3 + $0x254] sm:$0xf]
  %v474 = vld [vmem:[%s3 + $0x258] sm:$0xff]
  %v475 = vld [vmem:[%s3 + $0x260] sm:$0xf]
  %v476 = vld [vmem:[%s3 + $0x264] sm:$0xff]
  %v477 = vld [vmem:[%s3 + $0x26c] sm:$0xf]
  %v478 = vld [vmem:[%s3 + $0x270] sm:$0xff]
  %v479 = vld [vmem:[%s3 + $0x278] sm:$0xf]
  %v480 = vld [vmem:[%s3 + $0x27c] sm:$0xff]
  %v481 = vld [vmem:[%s3 + $0x284] sm:$0xf]
  %v482 = vld [vmem:[%s3 + $0x288] sm:$0xff]
  %v483 = vld [vmem:[%s3 + $0x290] sm:$0xf]
  %v484 = vld [vmem:[%s3 + $0x294] sm:$0xff]
  %v485 = vld [vmem:[%s3 + $0x29c] sm:$0xf]
  %v486 = vld [vmem:[%s3 + $0x2a0] sm:$0xff]
  %v487 = vld [vmem:[%s3 + $0x2a8] sm:$0xf]
  %v488 = vld [vmem:[%s3 + $0x2ac] sm:$0xff]
  %v489 = vld [vmem:[%s3 + $0x2b4] sm:$0xf]
  %v490 = vld [vmem:[%s3 + $0x2b8] sm:$0xff]
  %v491 = vld [vmem:[%s3 + $0x2c0] sm:$0xf]
  %v492 = vld [vmem:[%s3 + $0x2c4] sm:$0xff]
  %v493 = vld [vmem:[%s3 + $0x2cc] sm:$0xf]
  %v494 = vld [vmem:[%s3 + $0x2d0] sm:$0xff]
  %v495 = vld [vmem:[%s3 + $0x2d8] sm:$0xf]
  %v496 = vld [vmem:[%s3 + $0x2dc] sm:$0xff]
  %v497 = vld [vmem:[%s3 + $0x2e4] sm:$0xf]
  %v498 = vld [vmem:[%s3 + $0x2e8] sm:$0xff]
  %v499 = vld [vmem:[%s3 + $0x2f0] sm:$0xf]
  %v500 = vld [vmem:[%s3 + $0x2f4] sm:$0xff]
  %v501 = vld [vmem:[%s3 + $0x2fc] sm:$0xf]
  %v502 = vld [vmem:[%s4] sm:$0x7]
  %v504 = vlaneseq
  %v505 = vshrl.u32 %v504, 7
  %v506 = vsub.s32 0, %v505
  %v507 = vrot.slane %v502, %v506
  %v508 = vlaneseq
  %v509 = vshrl.u32 %v508, 7
  %v510 = vsub.s32 1, %v509
  %v511 = vrot.slane %v502, %v510
  %v512 = vlaneseq
  %v513 = vshrl.u32 %v512, 7
  %v514 = vsub.s32 2, %v513
  %v515 = vrot.slane %v502, %v514
  %v647 = vunpack.c.l.b16 %v374
  %v648 = vunpack.c.h.b16 %v374
  %v649 = vunpack.c.l.b16 %v375
  %v650 = vunpack.c.l.b16 %v376
  %v651 = vunpack.c.h.b16 %v376
  %v652 = vunpack.c.l.b16 %v377
  %v653 = vunpack.c.l.b16 %v378
  %v654 = vunpack.c.h.b16 %v378
  %v655 = vunpack.c.l.b16 %v379
  %v656 = vunpack.c.l.b16 %v380
  %v657 = vunpack.c.h.b16 %v380
  %v658 = vunpack.c.l.b16 %v381
  %v659 = vunpack.c.l.b16 %v382
  %v660 = vunpack.c.h.b16 %v382
  %v661 = vunpack.c.l.b16 %v383
  %v662 = vunpack.c.l.b16 %v384
  %v663 = vunpack.c.h.b16 %v384
  %v664 = vunpack.c.l.b16 %v385
  %v665 = vunpack.c.l.b16 %v386
  %v666 = vunpack.c.h.b16 %v386
  %v667 = vunpack.c.l.b16 %v387
  %v668 = vunpack.c.l.b16 %v388
  %v669 = vunpack.c.h.b16 %v388
  %v670 = vunpack.c.l.b16 %v389
  %v671 = vunpack.c.l.b16 %v390
  %v672 = vunpack.c.h.b16 %v390
  %v673 = vunpack.c.l.b16 %v391
  %v674 = vunpack.c.l.b16 %v392
  %v675 = vunpack.c.h.b16 %v392
  %v676 = vunpack.c.l.b16 %v393
  %v677 = vunpack.c.l.b16 %v394
  %v678 = vunpack.c.h.b16 %v394
  %v679 = vunpack.c.l.b16 %v395
  %v680 = vunpack.c.l.b16 %v396
  %v681 = vunpack.c.h.b16 %v396
  %v682 = vunpack.c.l.b16 %v397
  %v683 = vunpack.c.l.b16 %v398
  %v684 = vunpack.c.h.b16 %v398
  %v685 = vunpack.c.l.b16 %v399
  %v686 = vunpack.c.l.b16 %v400
  %v687 = vunpack.c.h.b16 %v400
  %v688 = vunpack.c.l.b16 %v401
  %v689 = vunpack.c.l.b16 %v402
  %v690 = vunpack.c.h.b16 %v402
  %v691 = vunpack.c.l.b16 %v403
  %v692 = vunpack.c.l.b16 %v404
  %v693 = vunpack.c.h.b16 %v404
  %v694 = vunpack.c.l.b16 %v405
  %v695 = vunpack.c.l.b16 %v406
  %v696 = vunpack.c.h.b16 %v406
  %v697 = vunpack.c.l.b16 %v407
  %v698 = vunpack.c.l.b16 %v408
  %v699 = vunpack.c.h.b16 %v408
  %v700 = vunpack.c.l.b16 %v409
  %v701 = vunpack.c.l.b16 %v410
  %v702 = vunpack.c.h.b16 %v410
  %v703 = vunpack.c.l.b16 %v411
  %v704 = vunpack.c.l.b16 %v412
  %v705 = vunpack.c.h.b16 %v412
  %v706 = vunpack.c.l.b16 %v413
  %v707 = vunpack.c.l.b16 %v414
  %v708 = vunpack.c.h.b16 %v414
  %v709 = vunpack.c.l.b16 %v415
  %v710 = vunpack.c.l.b16 %v416
  %v711 = vunpack.c.h.b16 %v416
  %v712 = vunpack.c.l.b16 %v417
  %v713 = vunpack.c.l.b16 %v418
  %v714 = vunpack.c.h.b16 %v418
  %v715 = vunpack.c.l.b16 %v419
  %v716 = vunpack.c.l.b16 %v420
  %v717 = vunpack.c.h.b16 %v420
  %v718 = vunpack.c.l.b16 %v421
  %v719 = vunpack.c.l.b16 %v422
  %v720 = vunpack.c.h.b16 %v422
  %v721 = vunpack.c.l.b16 %v423
  %v722 = vunpack.c.l.b16 %v424
  %v723 = vunpack.c.h.b16 %v424
  %v724 = vunpack.c.l.b16 %v425
  %v725 = vunpack.c.l.b16 %v426
  %v726 = vunpack.c.h.b16 %v426
  %v727 = vunpack.c.l.b16 %v427
  %v728 = vunpack.c.l.b16 %v428
  %v729 = vunpack.c.h.b16 %v428
  %v730 = vunpack.c.l.b16 %v429
  %v731 = vunpack.c.l.b16 %v430
  %v732 = vunpack.c.h.b16 %v430
  %v733 = vunpack.c.l.b16 %v431
  %v734 = vunpack.c.l.b16 %v432
  %v735 = vunpack.c.h.b16 %v432
  %v736 = vunpack.c.l.b16 %v433
  %v737 = vunpack.c.l.b16 %v434
  %v738 = vunpack.c.h.b16 %v434
  %v739 = vunpack.c.l.b16 %v435
  %v740 = vunpack.c.l.b16 %v436
  %v741 = vunpack.c.h.b16 %v436
  %v742 = vunpack.c.l.b16 %v437
  %v743 = vunpack.c.l.b16 %v438
  %v744 = vunpack.c.h.b16 %v438
  %v745 = vunpack.c.l.b16 %v439
  %v746 = vunpack.c.l.b16 %v440
  %v747 = vunpack.c.h.b16 %v440
  %v748 = vunpack.c.l.b16 %v441
  %v749 = vunpack.c.l.b16 %v442
  %v750 = vunpack.c.h.b16 %v442
  %v751 = vunpack.c.l.b16 %v443
  %v752 = vunpack.c.l.b16 %v444
  %v753 = vunpack.c.h.b16 %v444
  %v754 = vunpack.c.l.b16 %v445
  %v755 = vunpack.c.l.b16 %v446
  %v756 = vunpack.c.h.b16 %v446
  %v757 = vunpack.c.l.b16 %v447
  %v758 = vunpack.c.l.b16 %v448
  %v759 = vunpack.c.h.b16 %v448
  %v760 = vunpack.c.l.b16 %v449
  %v761 = vunpack.c.l.b16 %v450
  %v762 = vunpack.c.h.b16 %v450
  %v763 = vunpack.c.l.b16 %v451
  %v764 = vunpack.c.l.b16 %v452
  %v765 = vunpack.c.h.b16 %v452
  %v766 = vunpack.c.l.b16 %v453
  %v767 = vunpack.c.l.b16 %v454
  %v768 = vunpack.c.h.b16 %v454
  %v769 = vunpack.c.l.b16 %v455
  %v770 = vunpack.c.l.b16 %v456
  %v771 = vunpack.c.h.b16 %v456
  %v772 = vunpack.c.l.b16 %v457
  %v773 = vunpack.c.l.b16 %v458
  %v774 = vunpack.c.h.b16 %v458
  %v775 = vunpack.c.l.b16 %v459
  %v776 = vunpack.c.l.b16 %v460
  %v777 = vunpack.c.h.b16 %v460
  %v778 = vunpack.c.l.b16 %v461
  %v779 = vunpack.c.l.b16 %v462
  %v780 = vunpack.c.h.b16 %v462
  %v781 = vunpack.c.l.b16 %v463
  %v782 = vunpack.c.l.b16 %v464
  %v783 = vunpack.c.h.b16 %v464
  %v784 = vunpack.c.l.b16 %v465
  %v785 = vunpack.c.l.b16 %v466
  %v786 = vunpack.c.h.b16 %v466
  %v787 = vunpack.c.l.b16 %v467
  %v788 = vunpack.c.l.b16 %v468
  %v789 = vunpack.c.h.b16 %v468
  %v790 = vunpack.c.l.b16 %v469
  %v791 = vunpack.c.l.b16 %v470
  %v792 = vunpack.c.h.b16 %v470
  %v793 = vunpack.c.l.b16 %v471
  %v794 = vunpack.c.l.b16 %v472
  %v795 = vunpack.c.h.b16 %v472
  %v796 = vunpack.c.l.b16 %v473
  %v797 = vunpack.c.l.b16 %v474
  %v798 = vunpack.c.h.b16 %v474
  %v799 = vunpack.c.l.b16 %v475
  %v800 = vunpack.c.l.b16 %v476
  %v801 = vunpack.c.h.b16 %v476
  %v802 = vunpack.c.l.b16 %v477
  %v803 = vunpack.c.l.b16 %v478
  %v804 = vunpack.c.h.b16 %v478
  %v805 = vunpack.c.l.b16 %v479
  %v806 = vunpack.c.l.b16 %v480
  %v807 = vunpack.c.h.b16 %v480
  %v808 = vunpack.c.l.b16 %v481
  %v809 = vunpack.c.l.b16 %v482
  %v810 = vunpack.c.h.b16 %v482
  %v811 = vunpack.c.l.b16 %v483
  %v812 = vunpack.c.l.b16 %v484
  %v813 = vunpack.c.h.b16 %v484
  %v814 = vunpack.c.l.b16 %v485
  %v815 = vunpack.c.l.b16 %v486
  %v816 = vunpack.c.h.b16 %v486
  %v817 = vunpack.c.l.b16 %v487
  %v818 = vunpack.c.l.b16 %v488
  %v819 = vunpack.c.h.b16 %v488
  %v820 = vunpack.c.l.b16 %v489
  %v821 = vunpack.c.l.b16 %v490
  %v822 = vunpack.c.h.b16 %v490
  %v823 = vunpack.c.l.b16 %v491
  %v824 = vunpack.c.l.b16 %v492
  %v825 = vunpack.c.h.b16 %v492
  %v826 = vunpack.c.l.b16 %v493
  %v827 = vunpack.c.l.b16 %v494
  %v828 = vunpack.c.h.b16 %v494
  %v829 = vunpack.c.l.b16 %v495
  %v830 = vunpack.c.l.b16 %v496
  %v831 = vunpack.c.h.b16 %v496
  %v832 = vunpack.c.l.b16 %v497
  %v833 = vunpack.c.l.b16 %v498
  %v834 = vunpack.c.h.b16 %v498
  %v835 = vunpack.c.l.b16 %v499
  %v836 = vunpack.c.l.b16 %v500
  %v837 = vunpack.c.h.b16 %v500
  %v838 = vunpack.c.l.b16 %v501
  %v839 = vpack.c.b16 %v650, %v647
  %v840 = vpack.c.b16 %v651, %v648
  %v841 = vpack.c.b16 %v652, %v649
  %v842 = vpack.c.b16 %v656, %v653
  %v843 = vpack.c.b16 %v657, %v654
  %v844 = vpack.c.b16 %v658, %v655
  %v845 = vpack.c.b16 %v662, %v659
  %v846 = vpack.c.b16 %v663, %v660
  %v847 = vpack.c.b16 %v664, %v661
  %v848 = vpack.c.b16 %v668, %v665
  %v849 = vpack.c.b16 %v669, %v666
  %v850 = vpack.c.b16 %v670, %v667
  %v851 = vpack.c.b16 %v674, %v671
  %v852 = vpack.c.b16 %v675, %v672
  %v853 = vpack.c.b16 %v676, %v673
  %v854 = vpack.c.b16 %v680, %v677
  %v855 = vpack.c.b16 %v681, %v678
  %v856 = vpack.c.b16 %v682, %v679
  %v857 = vpack.c.b16 %v686, %v683
  %v858 = vpack.c.b16 %v687, %v684
  %v859 = vpack.c.b16 %v688, %v685
  %v860 = vpack.c.b16 %v692, %v689
  %v861 = vpack.c.b16 %v693, %v690
  %v862 = vpack.c.b16 %v694, %v691
  %v863 = vpack.c.b16 %v698, %v695
  %v864 = vpack.c.b16 %v699, %v696
  %v865 = vpack.c.b16 %v700, %v697
  %v866 = vpack.c.b16 %v704, %v701
  %v867 = vpack.c.b16 %v705, %v702
  %v868 = vpack.c.b16 %v706, %v703
  %v869 = vpack.c.b16 %v710, %v707
  %v870 = vpack.c.b16 %v711, %v708
  %v871 = vpack.c.b16 %v712, %v709
  %v872 = vpack.c.b16 %v716, %v713
  %v873 = vpack.c.b16 %v717, %v714
  %v874 = vpack.c.b16 %v718, %v715
  %v875 = vpack.c.b16 %v722, %v719
  %v876 = vpack.c.b16 %v723, %v720
  %v877 = vpack.c.b16 %v724, %v721
  %v878 = vpack.c.b16 %v728, %v725
  %v879 = vpack.c.b16 %v729, %v726
  %v880 = vpack.c.b16 %v730, %v727
  %v881 = vpack.c.b16 %v734, %v731
  %v882 = vpack.c.b16 %v735, %v732
  %v883 = vpack.c.b16 %v736, %v733
  %v884 = vpack.c.b16 %v740, %v737
  %v885 = vpack.c.b16 %v741, %v738
  %v886 = vpack.c.b16 %v742, %v739
  %v887 = vpack.c.b16 %v746, %v743
  %v888 = vpack.c.b16 %v747, %v744
  %v889 = vpack.c.b16 %v748, %v745
  %v890 = vpack.c.b16 %v752, %v749
  %v891 = vpack.c.b16 %v753, %v750
  %v892 = vpack.c.b16 %v754, %v751
  %v893 = vpack.c.b16 %v758, %v755
  %v894 = vpack.c.b16 %v759, %v756
  %v895 = vpack.c.b16 %v760, %v757
  %v896 = vpack.c.b16 %v764, %v761
  %v897 = vpack.c.b16 %v765, %v762
  %v898 = vpack.c.b16 %v766, %v763
  %v899 = vpack.c.b16 %v770, %v767
  %v900 = vpack.c.b16 %v771, %v768
  %v901 = vpack.c.b16 %v772, %v769
  %v902 = vpack.c.b16 %v776, %v773
  %v903 = vpack.c.b16 %v777, %v774
  %v904 = vpack.c.b16 %v778, %v775
  %v905 = vpack.c.b16 %v782, %v779
  %v906 = vpack.c.b16 %v783, %v780
  %v907 = vpack.c.b16 %v784, %v781
  %v908 = vpack.c.b16 %v788, %v785
  %v909 = vpack.c.b16 %v789, %v786
  %v910 = vpack.c.b16 %v790, %v787
  %v911 = vpack.c.b16 %v794, %v791
  %v912 = vpack.c.b16 %v795, %v792
  %v913 = vpack.c.b16 %v796, %v793
  %v914 = vpack.c.b16 %v800, %v797
  %v915 = vpack.c.b16 %v801, %v798
  %v916 = vpack.c.b16 %v802, %v799
  %v917 = vpack.c.b16 %v806, %v803
  %v918 = vpack.c.b16 %v807, %v804
  %v919 = vpack.c.b16 %v808, %v805
  %v920 = vpack.c.b16 %v812, %v809
  %v921 = vpack.c.b16 %v813, %v810
  %v922 = vpack.c.b16 %v814, %v811
  %v923 = vpack.c.b16 %v818, %v815
  %v924 = vpack.c.b16 %v819, %v816
  %v925 = vpack.c.b16 %v820, %v817
  %v926 = vpack.c.b16 %v824, %v821
  %v927 = vpack.c.b16 %v825, %v822
  %v928 = vpack.c.b16 %v826, %v823
  %v929 = vpack.c.b16 %v830, %v827
  %v930 = vpack.c.b16 %v831, %v828
  %v931 = vpack.c.b16 %v832, %v829
  %v932 = vpack.c.b16 %v836, %v833
  %v933 = vpack.c.b16 %v837, %v834
  %v934 = vpack.c.b16 %v838, %v835
  %1031 = vmatprep.subr.bf16.mxu0 %v840
  %1032 = vmatpush1.bf16.msra.mxu0 %v839
  %1033 = vmatprep.subr.bf16.mxu0 %v843
  %1034 = vmatpush1.bf16.msra.mxu0 %v842
  %1035 = vmatprep.subr.bf16.mxu0 %v846
  %1036 = vmatpush1.bf16.msra.mxu0 %v845
  %1037 = vmatprep.subr.bf16.mxu0 %v849
  %1038 = vmatpush1.bf16.msra.mxu0 %v848
  %1039 = vmatprep.subr.bf16.mxu0 %v852
  %1040 = vmatpush1.bf16.msra.mxu0 %v851
  %1041 = vmatprep.subr.bf16.mxu0 %v855
  %1042 = vmatpush1.bf16.msra.mxu0 %v854
  %1043 = vmatprep.subr.bf16.mxu0 %v858
  %1044 = vmatpush1.bf16.msra.mxu0 %v857
  %1045 = vmatprep.subr.bf16.mxu0 %v861
  %1046 = vmatpush1.bf16.msra.mxu0 %v860
  %1047 = vmatprep.subr.bf16.mxu0 %v864
  %1048 = vmatpush1.bf16.msra.mxu0 %v863
  %1049 = vmatprep.subr.bf16.mxu0 %v867
  %1050 = vmatpush1.bf16.msra.mxu0 %v866
  %1051 = vmatprep.subr.bf16.mxu0 %v870
  %1052 = vmatpush1.bf16.msra.mxu0 %v869
  %1053 = vmatprep.subr.bf16.mxu0 %v873
  %1054 = vmatpush1.bf16.msra.mxu0 %v872
  %1055 = vmatprep.subr.bf16.mxu0 %v876
  %1056 = vmatpush1.bf16.msra.mxu0 %v875
  %1057 = vmatprep.subr.bf16.mxu0 %v879
  %1058 = vmatpush1.bf16.msra.mxu0 %v878
  %1059 = vmatprep.subr.bf16.mxu0 %v882
  %1060 = vmatpush1.bf16.msra.mxu0 %v881
  %1061 = vmatprep.subr.bf16.mxu0 %v885
  %1062 = vmatpush1.bf16.msra.mxu0 %v884
  %1063 = vmatprep.mubr.bf16.mxu0 %v371
  %1064 = vmatmul.mubr.bf16.gmra.mrb[0].mxu0 %v370
  %v1065 = vpop.f32.mrb[0].mxu0
  %v1066 = vadd.f32 %v507, %v1065
  %v1067 = vpop.f32.mrb[0].mxu0
  %v1068 = vadd.f32 %v511, %v1067
  %v1069 = vpop.f32.mrb[0].mxu0
  %v1070 = vadd.f32 %v507, %v1069
  %v1071 = vpop.f32.mrb[0].mxu0
  %v1072 = vadd.f32 %v511, %v1071
  %1073 = vdwg.mxu0
  %1074 = vmatprep.subr.bf16.mxu0 %v888
  %1075 = vmatpush1.bf16.msra.mxu0 %v887
  %1076 = vmatprep.subr.bf16.mxu0 %v891
  %1077 = vmatpush1.bf16.msra.mxu0 %v890
  %1078 = vmatprep.subr.bf16.mxu0 %v894
  %1079 = vmatpush1.bf16.msra.mxu0 %v893
  %1080 = vmatprep.subr.bf16.mxu0 %v897
  %1081 = vmatpush1.bf16.msra.mxu0 %v896
  %1082 = vmatprep.subr.bf16.mxu0 %v900
  %1083 = vmatpush1.bf16.msra.mxu0 %v899
  %1084 = vmatprep.subr.bf16.mxu0 %v903
  %1085 = vmatpush1.bf16.msra.mxu0 %v902
  %1086 = vmatprep.subr.bf16.mxu0 %v906
  %1087 = vmatpush1.bf16.msra.mxu0 %v905
  %1088 = vmatprep.subr.bf16.mxu0 %v909
  %1089 = vmatpush1.bf16.msra.mxu0 %v908
  %1090 = vmatprep.subr.bf16.mxu0 %v912
  %1091 = vmatpush1.bf16.msra.mxu0 %v911
  %1092 = vmatprep.subr.bf16.mxu0 %v915
  %1093 = vmatpush1.bf16.msra.mxu0 %v914
  %1094 = vmatprep.subr.bf16.mxu0 %v918
  %1095 = vmatpush1.bf16.msra.mxu0 %v917
  %1096 = vmatprep.subr.bf16.mxu0 %v921
  %1097 = vmatpush1.bf16.msra.mxu0 %v920
  %1098 = vmatprep.subr.bf16.mxu0 %v924
  %1099 = vmatpush1.bf16.msra.mxu0 %v923
  %1100 = vmatprep.subr.bf16.mxu0 %v927
  %1101 = vmatpush1.bf16.msra.mxu0 %v926
  %1102 = vmatprep.subr.bf16.mxu0 %v930
  %1103 = vmatpush1.bf16.msra.mxu0 %v929
  %1104 = vmatprep.subr.bf16.mxu0 %v933
  %1105 = vmatpush1.bf16.msra.mxu0 %v932
  %1106 = vmatprep.mubr.bf16.mxu0 %v373
  %1107 = vmatmul.mubr.bf16.gmra.mrb[0].mxu0 %v372
  %v1108 = vpop.f32.mrb[0].mxu0
  %v1109 = vadd.f32 %v1066, %v1108
  %v1110 = vpop.f32.mrb[0].mxu0
  %v1111 = vadd.f32 %v1068, %v1110
  %v1112 = vpop.f32.mrb[0].mxu0
  %v1113 = vadd.f32 %v1070, %v1112
  %v1114 = vpop.f32.mrb[0].mxu0
  %v1115 = vadd.f32 %v1072, %v1114
  %1116 = vdwg.mxu0
  %1117 = vmatprep.subr.bf16.mxu0 0
  %1118 = vmatpush1.bf16.msra.mxu0 %v841
  %1119 = vmatprep.subr.bf16.mxu0 0
  %1120 = vmatpush1.bf16.msra.mxu0 %v844
  %1121 = vmatprep.subr.bf16.mxu0 0
  %1122 = vmatpush1.bf16.msra.mxu0 %v847
  %1123 = vmatprep.subr.bf16.mxu0 0
  %1124 = vmatpush1.bf16.msra.mxu0 %v850
  %1125 = vmatprep.subr.bf16.mxu0 0
  %1126 = vmatpush1.bf16.msra.mxu0 %v853
  %1127 = vmatprep.subr.bf16.mxu0 0
  %1128 = vmatpush1.bf16.msra.mxu0 %v856
  %1129 = vmatprep.subr.bf16.mxu0 0
  %1130 = vmatpush1.bf16.msra.mxu0 %v859
  %1131 = vmatprep.subr.bf16.mxu0 0
  %1132 = vmatpush1.bf16.msra.mxu0 %v862
  %1133 = vmatprep.subr.bf16.mxu0 0
  %1134 = vmatpush1.bf16.msra.mxu0 %v865
  %1135 = vmatprep.subr.bf16.mxu0 0
  %1136 = vmatpush1.bf16.msra.mxu0 %v868
  %1137 = vmatprep.subr.bf16.mxu0 0
  %1138 = vmatpush1.bf16.msra.mxu0 %v871
  %1139 = vmatprep.subr.bf16.mxu0 0
  %1140 = vmatpush1.bf16.msra.mxu0 %v874
  %1141 = vmatprep.subr.bf16.mxu0 0
  %1142 = vmatpush1.bf16.msra.mxu0 %v877
  %1143 = vmatprep.subr.bf16.mxu0 0
  %1144 = vmatpush1.bf16.msra.mxu0 %v880
  %1145 = vmatprep.subr.bf16.mxu0 0
  %1146 = vmatpush1.bf16.msra.mxu0 %v883
  %1147 = vmatprep.subr.bf16.mxu0 0
  %1148 = vmatpush1.bf16.msra.mxu0 %v886
  %1149 = vmatprep.mubr.bf16.mxu0 %v371
  %1150 = vmatmul.mubr.bf16.gmra.mrb[0].mxu0 %v370
  %v1151 = vpop.f32.mrb[0].mxu0
  %v1152 = vadd.f32 %v515, %v1151
  %v1153 = vpop.f32.mrb[0].mxu0
  %v1154 = vpop.f32.mrb[0].mxu0
  %v1155 = vadd.f32 %v515, %v1154
  %v1156 = vpop.f32.mrb[0].mxu0
  %1157 = vdwg.mxu0
  %1158 = vmatprep.subr.bf16.mxu0 0
  %1159 = vmatpush1.bf16.msra.mxu0 %v889
  %1160 = vmatprep.subr.bf16.mxu0 0
  %1161 = vmatpush1.bf16.msra.mxu0 %v892
  %1162 = vmatprep.subr.bf16.mxu0 0
  %1163 = vmatpush1.bf16.msra.mxu0 %v895
  %1164 = vmatprep.subr.bf16.mxu0 0
  %1165 = vmatpush1.bf16.msra.mxu0 %v898
  %1166 = vmatprep.subr.bf16.mxu0 0
  %1167 = vmatpush1.bf16.msra.mxu0 %v901
  %1168 = vmatprep.subr.bf16.mxu0 0
  %1169 = vmatpush1.bf16.msra.mxu0 %v904
  %1170 = vmatprep.subr.bf16.mxu0 0
  %1171 = vmatpush1.bf16.msra.mxu0 %v907
  %1172 = vmatprep.subr.bf16.mxu0 0
  %1173 = vmatpush1.bf16.msra.mxu0 %v910
  %1174 = vmatprep.subr.bf16.mxu0 0
  %1175 = vmatpush1.bf16.msra.mxu0 %v913
  %1176 = vmatprep.subr.bf16.mxu0 0
  %1177 = vmatpush1.bf16.msra.mxu0 %v916
  %1178 = vmatprep.subr.bf16.mxu0 0
  %1179 = vmatpush1.bf16.msra.mxu0 %v919
  %1180 = vmatprep.subr.bf16.mxu0 0
  %1181 = vmatpush1.bf16.msra.mxu0 %v922
  %1182 = vmatprep.subr.bf16.mxu0 0
  %1183 = vmatpush1.bf16.msra.mxu0 %v925
  %1184 = vmatprep.subr.bf16.mxu0 0
  %1185 = vmatpush1.bf16.msra.mxu0 %v928
  %1186 = vmatprep.subr.bf16.mxu0 0
  %1187 = vmatpush1.bf16.msra.mxu0 %v931
  %1188 = vmatprep.subr.bf16.mxu0 0
  %1189 = vmatpush1.bf16.msra.mxu0 %v934
  %1190 = vmatprep.mubr.bf16.mxu0 %v373
  %1191 = vmatmul.mubr.bf16.gmra.mrb[0].mxu0 %v372
  %v1192 = vpop.f32.mrb[0].mxu0
  %v1193 = vadd.f32 %v1152, %v1192
  %v1194 = vpop.f32.mrb[0].mxu0
  %v1195 = vpop.f32.mrb[0].mxu0
  %v1196 = vadd.f32 %v1155, %v1195
  %v1197 = vpop.f32.mrb[0].mxu0
  %1198 = vdwg.mxu0
  %v1199 = vpack.c.bf16 %v1113, %v1109
  %v1200 = vpack.c.bf16 %v1115, %v1111
  %v1201 = vpack.c.bf16 %v1196, %v1193
  %v1202 = vmul.bf16 %v1199, 1056980736
  %v1203 = vmul.bf16 %v1200, 1056980736
  %v1204 = vmul.bf16 %v1201, 1056980736
  %v1205 = vtanh.bf16.pop %v1202
  %v1206 = vtanh.bf16.pop %v1203
  %v1207 = vtanh.bf16.pop %v1204
  %v1208 = vmul.bf16 %v1205, 1056980736
  %v1209 = vmul.bf16 %v1206, 1056980736
  %v1210 = vmul.bf16 %v1207, 1056980736
  %v1211 = vadd.bf16 %v1208, 1056980736
  %v1212 = vadd.bf16 %v1209, 1056980736
  %v1213 = vadd.bf16 %v1210, 1056980736
  %v1214 = vld [vmem:[%s5] sm:$0xf]
  %v1215 = vld [vmem:[%s5 + $0x4] sm:$0xf]
  %v1216 = vld [vmem:[%s5 + $0x8] sm:$0xf]
  %v1217 = vld [vmem:[%s5 + $0xc] sm:$0xf]
  %v1218 = vld [vmem:[%s5 + $0x10] sm:$0xf]
  %v1219 = vld [vmem:[%s5 + $0x14] sm:$0xf]
  %v1220 = vld [vmem:[%s5 + $0x18] sm:$0xf]
  %v1221 = vld [vmem:[%s5 + $0x1c] sm:$0xf]
  %v1222 = vld [vmem:[%s5 + $0x20] sm:$0xf]
  %v1223 = vld [vmem:[%s5 + $0x24] sm:$0xf]
  %v1224 = vld [vmem:[%s5 + $0x28] sm:$0xf]
  %v1225 = vld [vmem:[%s5 + $0x2c] sm:$0xf]
  %v1226 = vld [vmem:[%s5 + $0x30] sm:$0xf]
  %v1227 = vld [vmem:[%s5 + $0x34] sm:$0xf]
  %v1228 = vld [vmem:[%s5 + $0x38] sm:$0xf]
  %v1229 = vld [vmem:[%s5 + $0x3c] sm:$0xf]
  %v1230 = vld [vmem:[%s5 + $0x40] sm:$0xf]
  %v1231 = vld [vmem:[%s5 + $0x44] sm:$0xf]
  %v1232 = vld [vmem:[%s5 + $0x48] sm:$0xf]
  %v1233 = vld [vmem:[%s5 + $0x4c] sm:$0xf]
  %v1234 = vld [vmem:[%s5 + $0x50] sm:$0xf]
  %v1235 = vld [vmem:[%s5 + $0x54] sm:$0xf]
  %v1236 = vld [vmem:[%s5 + $0x58] sm:$0xf]
  %v1237 = vld [vmem:[%s5 + $0x5c] sm:$0xf]
  %v1238 = vld [vmem:[%s5 + $0x60] sm:$0xf]
  %v1239 = vld [vmem:[%s5 + $0x64] sm:$0xf]
  %v1240 = vld [vmem:[%s5 + $0x68] sm:$0xf]
  %v1241 = vld [vmem:[%s5 + $0x6c] sm:$0xf]
  %v1242 = vld [vmem:[%s5 + $0x70] sm:$0xf]
  %v1243 = vld [vmem:[%s5 + $0x74] sm:$0xf]
  %v1244 = vld [vmem:[%s5 + $0x78] sm:$0xf]
  %v1245 = vld [vmem:[%s5 + $0x7c] sm:$0xf]
  %v1246 = vld [vmem:[%s5 + $0x80] sm:$0xf]
  %v1247 = vld [vmem:[%s5 + $0x84] sm:$0xf]
  %v1248 = vld [vmem:[%s5 + $0x88] sm:$0xf]
  %v1249 = vld [vmem:[%s5 + $0x8c] sm:$0xf]
  %v1250 = vld [vmem:[%s5 + $0x90] sm:$0xf]
  %v1251 = vld [vmem:[%s5 + $0x94] sm:$0xf]
  %v1252 = vld [vmem:[%s5 + $0x98] sm:$0xf]
  %v1253 = vld [vmem:[%s5 + $0x9c] sm:$0xf]
  %v1254 = vld [vmem:[%s5 + $0xa0] sm:$0xf]
  %v1255 = vld [vmem:[%s5 + $0xa4] sm:$0xf]
  %v1256 = vld [vmem:[%s5 + $0xa8] sm:$0xf]
  %v1257 = vld [vmem:[%s5 + $0xac] sm:$0xf]
  %v1258 = vld [vmem:[%s5 + $0xb0] sm:$0xf]
  %v1259 = vld [vmem:[%s5 + $0xb4] sm:$0xf]
  %v1260 = vld [vmem:[%s5 + $0xb8] sm:$0xf]
  %v1261 = vld [vmem:[%s5 + $0xbc] sm:$0xf]
  %v1262 = vld [vmem:[%s6] sm:$0x1]
  %v1264 = vlaneseq
  %v1265 = vshrl.u32 %v1264, 7
  %v1266 = vsub.s32 0, %v1265
  %v1267 = vrot.slane %v1262, %v1266
  %v1317 = vunpack.c.l.b16 %v1214
  %v1318 = vunpack.c.l.b16 %v1215
  %v1319 = vunpack.c.l.b16 %v1216
  %v1320 = vunpack.c.l.b16 %v1217
  %v1321 = vunpack.c.l.b16 %v1218
  %v1322 = vunpack.c.l.b16 %v1219
  %v1323 = vunpack.c.l.b16 %v1220
  %v1324 = vunpack.c.l.b16 %v1221
  %v1325 = vunpack.c.l.b16 %v1222
  %v1326 = vunpack.c.l.b16 %v1223
  %v1327 = vunpack.c.l.b16 %v1224
  %v1328 = vunpack.c.l.b16 %v1225
  %v1329 = vunpack.c.l.b16 %v1226
  %v1330 = vunpack.c.l.b16 %v1227
  %v1331 = vunpack.c.l.b16 %v1228
  %v1332 = vunpack.c.l.b16 %v1229
  %v1333 = vunpack.c.l.b16 %v1230
  %v1334 = vunpack.c.l.b16 %v1231
  %v1335 = vunpack.c.l.b16 %v1232
  %v1336 = vunpack.c.l.b16 %v1233
  %v1337 = vunpack.c.l.b16 %v1234
  %v1338 = vunpack.c.l.b16 %v1235
  %v1339 = vunpack.c.l.b16 %v1236
  %v1340 = vunpack.c.l.b16 %v1237
  %v1341 = vunpack.c.l.b16 %v1238
  %v1342 = vunpack.c.l.b16 %v1239
  %v1343 = vunpack.c.l.b16 %v1240
  %v1344 = vunpack.c.l.b16 %v1241
  %v1345 = vunpack.c.l.b16 %v1242
  %v1346 = vunpack.c.l.b16 %v1243
  %v1347 = vunpack.c.l.b16 %v1244
  %v1348 = vunpack.c.l.b16 %v1245
  %v1349 = vunpack.c.l.b16 %v1246
  %v1350 = vunpack.c.l.b16 %v1247
  %v1351 = vunpack.c.l.b16 %v1248
  %v1352 = vunpack.c.l.b16 %v1249
  %v1353 = vunpack.c.l.b16 %v1250
  %v1354 = vunpack.c.l.b16 %v1251
  %v1355 = vunpack.c.l.b16 %v1252
  %v1356 = vunpack.c.l.b16 %v1253
  %v1357 = vunpack.c.l.b16 %v1254
  %v1358 = vunpack.c.l.b16 %v1255
  %v1359 = vunpack.c.l.b16 %v1256
  %v1360 = vunpack.c.l.b16 %v1257
  %v1361 = vunpack.c.l.b16 %v1258
  %v1362 = vunpack.c.l.b16 %v1259
  %v1363 = vunpack.c.l.b16 %v1260
  %v1364 = vunpack.c.l.b16 %v1261
  %v1365 = vpack.c.b16 %v1318, %v1317
  %v1366 = vpack.c.b16 %v1320, %v1319
  %v1367 = vpack.c.b16 %v1322, %v1321
  %v1368 = vpack.c.b16 %v1324, %v1323
  %v1369 = vpack.c.b16 %v1326, %v1325
  %v1370 = vpack.c.b16 %v1328, %v1327
  %v1371 = vpack.c.b16 %v1330, %v1329
  %v1372 = vpack.c.b16 %v1332, %v1331
  %v1373 = vpack.c.b16 %v1334, %v1333
  %v1374 = vpack.c.b16 %v1336, %v1335
  %v1375 = vpack.c.b16 %v1338, %v1337
  %v1376 = vpack.c.b16 %v1340, %v1339
  %v1377 = vpack.c.b16 %v1342, %v1341
  %v1378 = vpack.c.b16 %v1344, %v1343
  %v1379 = vpack.c.b16 %v1346, %v1345
  %v1380 = vpack.c.b16 %v1348, %v1347
  %v1381 = vpack.c.b16 %v1350, %v1349
  %v1382 = vpack.c.b16 %v1352, %v1351
  %v1383 = vpack.c.b16 %v1354, %v1353
  %v1384 = vpack.c.b16 %v1356, %v1355
  %v1385 = vpack.c.b16 %v1358, %v1357
  %v1386 = vpack.c.b16 %v1360, %v1359
  %v1387 = vpack.c.b16 %v1362, %v1361
  %v1388 = vpack.c.b16 %v1364, %v1363
  %1413 = vmatprep.subr.bf16.mxu0 0
  %1414 = vmatpush1.bf16.msra.mxu0 %v1365
  %1415 = vmatprep.subr.bf16.mxu0 0
  %1416 = vmatpush1.bf16.msra.mxu0 %v1366
  %1417 = vmatprep.subr.bf16.mxu0 0
  %1418 = vmatpush1.bf16.msra.mxu0 %v1367
  %1419 = vmatprep.subr.bf16.mxu0 0
  %1420 = vmatpush1.bf16.msra.mxu0 %v1368
  %1421 = vmatprep.subr.bf16.mxu0 0
  %1422 = vmatpush1.bf16.msra.mxu0 %v1369
  %1423 = vmatprep.subr.bf16.mxu0 0
  %1424 = vmatpush1.bf16.msra.mxu0 %v1370
  %1425 = vmatprep.subr.bf16.mxu0 0
  %1426 = vmatpush1.bf16.msra.mxu0 %v1371
  %1427 = vmatprep.subr.bf16.mxu0 0
  %1428 = vmatpush1.bf16.msra.mxu0 %v1372
  %1429 = vmatprep.subr.bf16.mxu0 0
  %1430 = vmatpush1.bf16.msra.mxu0 %v1373
  %1431 = vmatprep.subr.bf16.mxu0 0
  %1432 = vmatpush1.bf16.msra.mxu0 %v1374
  %1433 = vmatprep.subr.bf16.mxu0 0
  %1434 = vmatpush1.bf16.msra.mxu0 %v1375
  %1435 = vmatprep.subr.bf16.mxu0 0
  %1436 = vmatpush1.bf16.msra.mxu0 %v1376
  %1437 = vmatprep.subr.bf16.mxu0 0
  %1438 = vmatpush1.bf16.msra.mxu0 %v1377
  %1439 = vmatprep.subr.bf16.mxu0 0
  %1440 = vmatpush1.bf16.msra.mxu0 %v1378
  %1441 = vmatprep.subr.bf16.mxu0 0
  %1442 = vmatpush1.bf16.msra.mxu0 %v1379
  %1443 = vmatprep.subr.bf16.mxu0 0
  %1444 = vmatpush1.bf16.msra.mxu0 %v1380
  %1445 = vmatprep.mubr.bf16.mxu0 %v1212
  %1446 = vmatmul.mubr.bf16.gmra.mrb[0].mxu0 %v1211
  %v1447 = vpop.f32.mrb[0].mxu0
  %v1448 = vadd.f32 %v1267, %v1447
  %v1449 = vpop.f32.mrb[0].mxu0
  %v1450 = vpop.f32.mrb[0].mxu0
  %v1451 = vadd.f32 %v1267, %v1450
  %v1452 = vpop.f32.mrb[0].mxu0
  %1453 = vdwg.mxu0
  %1454 = vmatprep.subr.bf16.mxu0 0
  %1455 = vmatpush1.bf16.msra.mxu0 %v1381
  %1456 = vmatprep.subr.bf16.mxu0 0
  %1457 = vmatpush1.bf16.msra.mxu0 %v1382
  %1458 = vmatprep.subr.bf16.mxu0 0
  %1459 = vmatpush1.bf16.msra.mxu0 %v1383
  %1460 = vmatprep.subr.bf16.mxu0 0
  %1461 = vmatpush1.bf16.msra.mxu0 %v1384
  %1462 = vmatprep.subr.bf16.mxu0 0
  %1463 = vmatpush1.bf16.msra.mxu0 %v1385
  %1464 = vmatprep.subr.bf16.mxu0 0
  %1465 = vmatpush1.bf16.msra.mxu0 %v1386
  %1466 = vmatprep.subr.bf16.mxu0 0
  %1467 = vmatpush1.bf16.msra.mxu0 %v1387
  %1468 = vmatprep.subr.bf16.mxu0 0
  %1469 = vmatpush1.bf16.msra.mxu0 %v1388
  %1470 = vmatprep.subr.bf16.mxu0 0
  %1471 = vmatpush1.bf16.msra.mxu0 0
  %1472 = vmatprep.subr.bf16.mxu0 0
  %1473 = vmatpush1.bf16.msra.mxu0 0
  %1474 = vmatprep.subr.bf16.mxu0 0
  %1475 = vmatpush1.bf16.msra.mxu0 0
  %1476 = vmatprep.subr.bf16.mxu0 0
  %1477 = vmatpush1.bf16.msra.mxu0 0
  %1478 = vmatprep.subr.bf16.mxu0 0
  %1479 = vmatpush1.bf16.msra.mxu0 0
  %1480 = vmatprep.subr.bf16.mxu0 0
  %1481 = vmatpush1.bf16.msra.mxu0 0
  %1482 = vmatprep.subr.bf16.mxu0 0
  %1483 = vmatpush1.bf16.msra.mxu0 0
  %1484 = vmatprep.subr.bf16.mxu0 0
  %1485 = vmatpush1.bf16.msra.mxu0 0
  %1486 = vmatprep.mubr.bf16.mxu0 0
  %1487 = vmatmul.mubr.bf16.gmra.mrb[0].mxu0 %v1213
  %v1488 = vpop.f32.mrb[0].mxu0
  %v1489 = vadd.f32 %v1448, %v1488
  %v1490 = vpop.f32.mrb[0].mxu0
  %v1491 = vpop.f32.mrb[0].mxu0
  %v1492 = vadd.f32 %v1451, %v1491
  %v1493 = vpop.f32.mrb[0].mxu0
  %1494 = vdwg.mxu0
  %v1495 = vpack.c.bf16 %v1492, %v1489
  %v1496 = vmul.bf16 %v1495, 1056980736
  %v1497 = vtanh.bf16.pop %v1496
  %v1498 = vmul.bf16 %v1497, 1056980736
  %v1499 = vadd.bf16 %v1498, 1056980736
  %v1500 = vld [vmem:[%s7] sm:$0xf]
  %v1501 = vld [vmem:[%s7 + $0x4] sm:$0xf]
  %v1502 = vld [vmem:[%s7 + $0x8] sm:$0xf]
  %v1503 = vld [vmem:[%s7 + $0xc] sm:$0xf]
  %v1504 = vld [vmem:[%s7 + $0x10] sm:$0xf]
  %v1505 = vld [vmem:[%s7 + $0x14] sm:$0xf]
  %v1506 = vld [vmem:[%s7 + $0x18] sm:$0xf]
  %v1507 = vld [vmem:[%s7 + $0x1c] sm:$0xf]
  %v1508 = vld [vmem:[%s7 + $0x20] sm:$0xf]
  %v1509 = vld [vmem:[%s7 + $0x24] sm:$0xf]
  %v1510 = vld [vmem:[%s7 + $0x28] sm:$0xf]
  %v1511 = vld [vmem:[%s7 + $0x2c] sm:$0xf]
  %v1512 = vld [vmem:[%s7 + $0x30] sm:$0xf]
  %v1513 = vld [vmem:[%s7 + $0x34] sm:$0xf]
  %v1514 = vld [vmem:[%s7 + $0x38] sm:$0xf]
  %v1515 = vld [vmem:[%s7 + $0x3c] sm:$0xf]
  %v1516 = vld [vmem:[%s8] sm:$0x1]
  %v1518 = vlaneseq
  %v1519 = vshrl.u32 %v1518, 7
  %v1520 = vsub.s32 0, %v1519
  %v1521 = vrot.slane %v1516, %v1520
  %v1539 = vunpack.c.l.b16 %v1500
  %v1540 = vunpack.c.l.b16 %v1501
  %v1541 = vunpack.c.l.b16 %v1502
  %v1542 = vunpack.c.l.b16 %v1503
  %v1543 = vunpack.c.l.b16 %v1504
  %v1544 = vunpack.c.l.b16 %v1505
  %v1545 = vunpack.c.l.b16 %v1506
  %v1546 = vunpack.c.l.b16 %v1507
  %v1547 = vunpack.c.l.b16 %v1508
  %v1548 = vunpack.c.l.b16 %v1509
  %v1549 = vunpack.c.l.b16 %v1510
  %v1550 = vunpack.c.l.b16 %v1511
  %v1551 = vunpack.c.l.b16 %v1512
  %v1552 = vunpack.c.l.b16 %v1513
  %v1553 = vunpack.c.l.b16 %v1514
  %v1554 = vunpack.c.l.b16 %v1515
  %v1555 = vpack.c.b16 %v1540, %v1539
  %v1556 = vpack.c.b16 %v1542, %v1541
  %v1557 = vpack.c.b16 %v1544, %v1543
  %v1558 = vpack.c.b16 %v1546, %v1545
  %v1559 = vpack.c.b16 %v1548, %v1547
  %v1560 = vpack.c.b16 %v1550, %v1549
  %v1561 = vpack.c.b16 %v1552, %v1551
  %v1562 = vpack.c.b16 %v1554, %v1553
  %1571 = vmatprep.subr.bf16.mxu0 0
  %1572 = vmatpush1.bf16.msra.mxu0 %v1555
  %1573 = vmatprep.subr.bf16.mxu0 0
  %1574 = vmatpush1.bf16.msra.mxu0 %v1556
  %1575 = vmatprep.subr.bf16.mxu0 0
  %1576 = vmatpush1.bf16.msra.mxu0 %v1557
  %1577 = vmatprep.subr.bf16.mxu0 0
  %1578 = vmatpush1.bf16.msra.mxu0 %v1558
  %1579 = vmatprep.subr.bf16.mxu0 0
  %1580 = vmatpush1.bf16.msra.mxu0 %v1559
  %1581 = vmatprep.subr.bf16.mxu0 0
  %1582 = vmatpush1.bf16.msra.mxu0 %v1560
  %1583 = vmatprep.subr.bf16.mxu0 0
  %1584 = vmatpush1.bf16.msra.mxu0 %v1561
  %1585 = vmatprep.subr.bf16.mxu0 0
  %1586 = vmatpush1.bf16.msra.mxu0 %v1562
  %1587 = vmatprep.subr.bf16.mxu0 0
  %1588 = vmatpush1.bf16.msra.mxu0 0
  %1589 = vmatprep.subr.bf16.mxu0 0
  %1590 = vmatpush1.bf16.msra.mxu0 0
  %1591 = vmatprep.subr.bf16.mxu0 0
  %1592 = vmatpush1.bf16.msra.mxu0 0
  %1593 = vmatprep.subr.bf16.mxu0 0
  %1594 = vmatpush1.bf16.msra.mxu0 0
  %1595 = vmatprep.subr.bf16.mxu0 0
  %1596 = vmatpush1.bf16.msra.mxu0 0
  %1597 = vmatprep.subr.bf16.mxu0 0
  %1598 = vmatpush1.bf16.msra.mxu0 0
  %1599 = vmatprep.subr.bf16.mxu0 0
  %1600 = vmatpush1.bf16.msra.mxu0 0
  %1601 = vmatprep.subr.bf16.mxu0 0
  %1602 = vmatpush1.bf16.msra.mxu0 0
  %1603 = vmatprep.mubr.bf16.mxu0 0
  %1604 = vmatmul.mubr.bf16.gmra.mrb[0].mxu0 %v1499
  %v1605 = vpop.f32.mrb[0].mxu0
  %v1606 = vadd.f32 %v1521, %v1605
  %v1607 = vpop.f32.mrb[0].mxu0
  %v1608 = vpop.f32.mrb[0].mxu0
  %v1609 = vadd.f32 %v1521, %v1608
  %v1610 = vpop.f32.mrb[0].mxu0
  %1611 = vdwg.mxu0
  %v1612 = vpack.c.bf16 %v1609, %v1606
  %v1613 = vmul.bf16 %v1612, 1056980736
  %v1614 = vtanh.bf16.pop %v1613
  %v1615 = vmul.bf16 %v1614, 1056980736
  %v1616 = vadd.bf16 %v1615, 1056980736
  %v1617 = vld [vmem:[%s9] sm:$0xf]
  %v1618 = vld [vmem:[%s9 + $0x4] sm:$0xf]
  %v1619 = vld [vmem:[%s9 + $0x8] sm:$0xf]
  %v1620 = vld [vmem:[%s9 + $0xc] sm:$0xf]
  %v1621 = vld [vmem:[%s9 + $0x10] sm:$0xf]
  %v1622 = vld [vmem:[%s9 + $0x14] sm:$0xf]
  %v1623 = vld [vmem:[%s9 + $0x18] sm:$0xf]
  %v1624 = vld [vmem:[%s9 + $0x1c] sm:$0xf]
  %v1625 = vld [vmem:[%s9 + $0x20] sm:$0xf]
  %v1626 = vld [vmem:[%s9 + $0x24] sm:$0xf]
  %v1627 = vld [vmem:[%s9 + $0x28] sm:$0xf]
  %v1628 = vld [vmem:[%s9 + $0x2c] sm:$0xf]
  %v1629 = vld [vmem:[%s9 + $0x30] sm:$0xf]
  %v1630 = vld [vmem:[%s9 + $0x34] sm:$0xf]
  %v1631 = vld [vmem:[%s9 + $0x38] sm:$0xf]
  %v1632 = vld [vmem:[%s9 + $0x3c] sm:$0xf]
  %v1633 = vld [vmem:[%s10] sm:$0x1]
  %v1635 = vlaneseq
  %v1636 = vshrl.u32 %v1635, 7
  %v1637 = vsub.s32 0, %v1636
  %v1638 = vrot.slane %v1633, %v1637
  %v1656 = vunpack.c.l.b16 %v1617
  %v1657 = vunpack.c.l.b16 %v1618
  %v1658 = vunpack.c.l.b16 %v1619
  %v1659 = vunpack.c.l.b16 %v1620
  %v1660 = vunpack.c.l.b16 %v1621
  %v1661 = vunpack.c.l.b16 %v1622
  %v1662 = vunpack.c.l.b16 %v1623
  %v1663 = vunpack.c.l.b16 %v1624
  %v1664 = vunpack.c.l.b16 %v1625
  %v1665 = vunpack.c.l.b16 %v1626
  %v1666 = vunpack.c.l.b16 %v1627
  %v1667 = vunpack.c.l.b16 %v1628
  %v1668 = vunpack.c.l.b16 %v1629
  %v1669 = vunpack.c.l.b16 %v1630
  %v1670 = vunpack.c.l.b16 %v1631
  %v1671 = vunpack.c.l.b16 %v1632
  %v1672 = vpack.c.b16 %v1657, %v1656
  %v1673 = vpack.c.b16 %v1659, %v1658
  %v1674 = vpack.c.b16 %v1661, %v1660
  %v1675 = vpack.c.b16 %v1663, %v1662
  %v1676 = vpack.c.b16 %v1665, %v1664
  %v1677 = vpack.c.b16 %v1667, %v1666
  %v1678 = vpack.c.b16 %v1669, %v1668
  %v1679 = vpack.c.b16 %v1671, %v1670
  %1688 = vmatprep.subr.bf16.mxu0 0
  %1689 = vmatpush1.bf16.msra.mxu0 %v1672
  %1690 = vmatprep.subr.bf16.mxu0 0
  %1691 = vmatpush1.bf16.msra.mxu0 %v1673
  %1692 = vmatprep.subr.bf16.mxu0 0
  %1693 = vmatpush1.bf16.msra.mxu0 %v1674
  %1694 = vmatprep.subr.bf16.mxu0 0
  %1695 = vmatpush1.bf16.msra.mxu0 %v1675
  %1696 = vmatprep.subr.bf16.mxu0 0
  %1697 = vmatpush1.bf16.msra.mxu0 %v1676
  %1698 = vmatprep.subr.bf16.mxu0 0
  %1699 = vmatpush1.bf16.msra.mxu0 %v1677
  %1700 = vmatprep.subr.bf16.mxu0 0
  %1701 = vmatpush1.bf16.msra.mxu0 %v1678
  %1702 = vmatprep.subr.bf16.mxu0 0
  %1703 = vmatpush1.bf16.msra.mxu0 %v1679
  %1704 = vmatprep.subr.bf16.mxu0 0
  %1705 = vmatpush1.bf16.msra.mxu0 0
  %1706 = vmatprep.subr.bf16.mxu0 0
  %1707 = vmatpush1.bf16.msra.mxu0 0
  %1708 = vmatprep.subr.bf16.mxu0 0
  %1709 = vmatpush1.bf16.msra.mxu0 0
  %1710 = vmatprep.subr.bf16.mxu0 0
  %1711 = vmatpush1.bf16.msra.mxu0 0
  %1712 = vmatprep.subr.bf16.mxu0 0
  %1713 = vmatpush1.bf16.msra.mxu0 0
  %1714 = vmatprep.subr.bf16.mxu0 0
  %1715 = vmatpush1.bf16.msra.mxu0 0
  %1716 = vmatprep.subr.bf16.mxu0 0
  %1717 = vmatpush1.bf16.msra.mxu0 0
  %1718 = vmatprep.subr.bf16.mxu0 0
  %1719 = vmatpush1.bf16.msra.mxu0 0
  %1720 = vmatprep.mubr.bf16.mxu0 0
  %1721 = vmatmul.mubr.bf16.gmra.mrb[0].mxu0 %v1616
  %v1722 = vpop.f32.mrb[0].mxu0
  %v1723 = vadd.f32 %v1638, %v1722
  %v1724 = vpop.f32.mrb[0].mxu0
  %v1725 = vpop.f32.mrb[0].mxu0
  %v1726 = vadd.f32 %v1638, %v1725
  %v1727 = vpop.f32.mrb[0].mxu0
  %1728 = vdwg.mxu0
  %v1729 = vpack.c.bf16 %v1726, %v1723
  %v1730 = vmul.bf16 %v1729, 1056980736
  %v1731 = vtanh.bf16.pop %v1730
  %v1732 = vmul.bf16 %v1731, 1056980736
  %v1733 = vadd.bf16 %v1732, 1056980736
  %v1734 = vld [vmem:[%s11] sm:$0xf]
  %v1735 = vld [vmem:[%s11 + $0x4] sm:$0xf]
  %v1736 = vld [vmem:[%s11 + $0x8] sm:$0xf]
  %v1737 = vld [vmem:[%s11 + $0xc] sm:$0xf]
  %v1738 = vld [vmem:[%s11 + $0x10] sm:$0xf]
  %v1739 = vld [vmem:[%s11 + $0x14] sm:$0xf]
  %v1740 = vld [vmem:[%s11 + $0x18] sm:$0xf]
  %v1741 = vld [vmem:[%s11 + $0x1c] sm:$0xf]
  %v1742 = vld [vmem:[%s11 + $0x20] sm:$0xf]
  %v1743 = vld [vmem:[%s11 + $0x24] sm:$0xf]
  %v1744 = vld [vmem:[%s11 + $0x28] sm:$0xf]
  %v1745 = vld [vmem:[%s11 + $0x2c] sm:$0xf]
  %v1746 = vld [vmem:[%s11 + $0x30] sm:$0xf]
  %v1747 = vld [vmem:[%s11 + $0x34] sm:$0xf]
  %v1748 = vld [vmem:[%s11 + $0x38] sm:$0xf]
  %v1749 = vld [vmem:[%s11 + $0x3c] sm:$0xf]
  %v1750 = vld [vmem:[%s12] sm:$0x1]
  %v1752 = vlaneseq
  %v1753 = vshrl.u32 %v1752, 7
  %v1754 = vsub.s32 0, %v1753
  %v1755 = vrot.slane %v1750, %v1754
  %v1773 = vunpack.c.l.b16 %v1734
  %v1774 = vunpack.c.l.b16 %v1735
  %v1775 = vunpack.c.l.b16 %v1736
  %v1776 = vunpack.c.l.b16 %v1737
  %v1777 = vunpack.c.l.b16 %v1738
  %v1778 = vunpack.c.l.b16 %v1739
  %v1779 = vunpack.c.l.b16 %v1740
  %v1780 = vunpack.c.l.b16 %v1741
  %v1781 = vunpack.c.l.b16 %v1742
  %v1782 = vunpack.c.l.b16 %v1743
  %v1783 = vunpack.c.l.b16 %v1744
  %v1784 = vunpack.c.l.b16 %v1745
  %v1785 = vunpack.c.l.b16 %v1746
  %v1786 = vunpack.c.l.b16 %v1747
  %v1787 = vunpack.c.l.b16 %v1748
  %v1788 = vunpack.c.l.b16 %v1749
  %v1789 = vpack.c.b16 %v1774, %v1773
  %v1790 = vpack.c.b16 %v1776, %v1775
  %v1791 = vpack.c.b16 %v1778, %v1777
  %v1792 = vpack.c.b16 %v1780, %v1779
  %v1793 = vpack.c.b16 %v1782, %v1781
  %v1794 = vpack.c.b16 %v1784, %v1783
  %v1795 = vpack.c.b16 %v1786, %v1785
  %v1796 = vpack.c.b16 %v1788, %v1787
  %1805 = vmatprep.subr.bf16.mxu0 0
  %1806 = vmatpush1.bf16.msra.mxu0 %v1789
  %1807 = vmatprep.subr.bf16.mxu0 0
  %1808 = vmatpush1.bf16.msra.mxu0 %v1790
  %1809 = vmatprep.subr.bf16.mxu0 0
  %1810 = vmatpush1.bf16.msra.mxu0 %v1791
  %1811 = vmatprep.subr.bf16.mxu0 0
  %1812 = vmatpush1.bf16.msra.mxu0 %v1792
  %1813 = vmatprep.subr.bf16.mxu0 0
  %1814 = vmatpush1.bf16.msra.mxu0 %v1793
  %1815 = vmatprep.subr.bf16.mxu0 0
  %1816 = vmatpush1.bf16.msra.mxu0 %v1794
  %1817 = vmatprep.subr.bf16.mxu0 0
  %1818 = vmatpush1.bf16.msra.mxu0 %v1795
  %1819 = vmatprep.subr.bf16.mxu0 0
  %1820 = vmatpush1.bf16.msra.mxu0 %v1796
  %1821 = vmatprep.subr.bf16.mxu0 0
  %1822 = vmatpush1.bf16.msra.mxu0 0
  %1823 = vmatprep.subr.bf16.mxu0 0
  %1824 = vmatpush1.bf16.msra.mxu0 0
  %1825 = vmatprep.subr.bf16.mxu0 0
  %1826 = vmatpush1.bf16.msra.mxu0 0
  %1827 = vmatprep.subr.bf16.mxu0 0
  %1828 = vmatpush1.bf16.msra.mxu0 0
  %1829 = vmatprep.subr.bf16.mxu0 0
  %1830 = vmatpush1.bf16.msra.mxu0 0
  %1831 = vmatprep.subr.bf16.mxu0 0
  %1832 = vmatpush1.bf16.msra.mxu0 0
  %1833 = vmatprep.subr.bf16.mxu0 0
  %1834 = vmatpush1.bf16.msra.mxu0 0
  %1835 = vmatprep.subr.bf16.mxu0 0
  %1836 = vmatpush1.bf16.msra.mxu0 0
  %1837 = vmatprep.mubr.bf16.mxu0 0
  %1838 = vmatmul.mubr.bf16.gmra.mrb[0].mxu0 %v1733
  %v1839 = vpop.f32.mrb[0].mxu0
  %v1840 = vadd.f32 %v1755, %v1839
  %v1841 = vpop.f32.mrb[0].mxu0
  %v1842 = vpop.f32.mrb[0].mxu0
  %v1843 = vadd.f32 %v1755, %v1842
  %v1844 = vpop.f32.mrb[0].mxu0
  %1845 = vdwg.mxu0
  %1846 = vst [vmem:[%s13] sm:$0xff] %v1840
  %1847 = vst [vmem:[%s13 + $0x8] sm:$0xff] %v1843
  // Predicated region
  $region54: #{_lambda_.1} parent=0 // pred_check
    _
  $region55: #{_lambda_.1} parent=0 // pred_check_branch
    %1849 = sbr.rel (0) target = $region57
  $region56: #{_lambda_.1} parent=0 // pred_region
    _
  $region57: #{_lambda_.1} parent=0 // pred_fallthru
    _
  // Predicated region
  $region58: #{_lambda_.1} parent=0 // pred_check
    _
  $region59: #{_lambda_.1} parent=0 // pred_check_branch
    %1851 = sbr.rel (0) target = $region61
  $region60: #{_lambda_.1} parent=0 // pred_region
    _
  $region61: #{_lambda_.1} parent=0 // pred_fallthru
    _

</llo_original>
